<compile_context>
chip_gen: v6e
topology: v6e:2x2x1
jax: 0.10.0
libtpu: 0.0.40
codegen_flags: <defaults>
</compile_context>

<pallas_src>
import jax
import jax.numpy as jnp
from jax import lax
from jax.experimental import pallas as pl
from jax.experimental.pallas import tpu as pltpu

# ---------------- config (small, consistent with the module) ----------------
BATCH = 2
TIME_STEPS = 8
HIDDEN = 32
WORD_VOCAB = 50
CHAR_VOCAB = 30
CHAR_EMB = 16
WORD_EMB = 16
CHAR_KERNELS = (2, 3)
WORD_KERNELS = (2, 3)
NUM_LAYERS = 1
MAX_WORD_LEN = 6   # chars per word  (conv H dim for char branch)
WORD_CTX = 5       # word context    (conv H dim for word branch)
FINAL_EMB = len(CHAR_KERNELS) + len(WORD_KERNELS)

D_CHAR = MAX_WORD_LEN * CHAR_EMB            # 96
D_WORD = WORD_CTX * WORD_EMB                # 80
D_CAT = D_CHAR + D_WORD                     # 176
CONV_P = tuple(MAX_WORD_LEN - k + 1 for k in CHAR_KERNELS) + \
         tuple(WORD_CTX - k + 1 for k in WORD_KERNELS)      # (5, 4, 4, 3)
V_PAD = ((WORD_VOCAB + 127) // 128) * 128   # 128: lane-dense logits / 4H width

BPAD = 8                                    # batch padded to 8 sublanes
GROUP_W = 8                                 # lanes per conv branch group
CONV_LANES = FINAL_EMB * GROUP_W            # 32 lanes used by the conv matmul
ONES_COL = D_CAT                            # xcat column holding constant 1.0
CONV_ROWS = ((D_CAT + 1 + 7) // 8) * 8      # 184: conv rows + ones row + pad
XCOLS = CONV_ROWS                           # xcat column count (padded)
WHH_OFF = CONV_ROWS                         # 184: W_hh.T rows in the slab
FCW_OFF = WHH_OFF + HIDDEN                  # 216: FC weight rows in the slab
SLAB_ROWS = FCW_OFF + HIDDEN                # 248


# ---------------- fused Pallas kernel ----------------
def _crnn_fused_kernel(x_ref, wslab_ref, bslab_ref, st0_ref, logits_ref, stateN_ref):
    # x_ref:      [T*BPAD, XCOLS] bf16  flattened (char|word|1|pad) embeddings, (t,b)-major
    # wslab_ref:  [SLAB_ROWS, 128] bf16 rows 0..183 conv Toeplitz (+lane-bias ones-row),
    #                                  rows 184..215 W_hh.T, rows 216..247 padded FC weight
    # bslab_ref:  [8, 128] f32   row 0 b_eff, row 1 fc_b(pad), rows 2..5 W_ih.T
    # st0_ref:    [2*BPAD, H] f32  rows 0..7 h0(pad), rows 8..15 c0(pad)
    # logits_ref: [T*BPAD, 128] f32 (lane-dense padded logits)
    # stateN_ref: [2*BPAD, H] f32
    H = HIDDEN
    T = TIME_STEPS
    Bp = BPAD

    bs = bslab_ref[...]                                   # [8, 128] f32
    b_eff = bs[0:1, :]
    fc_b = bs[1:2, :]

    # --- all 4 conv branches: ONE MXU matmul (block-diag Toeplitz, bf16 operands).
    # The ones-column row injects -1e30 on the unused lanes of each 8-lane group.
    conv_all = jnp.dot(x_ref[...], wslab_ref[0:CONV_ROWS, :],
                       preferred_element_type=jnp.float32)          # [T*Bp, 128]

    # --- hoisted input projection: gx = b_eff + sum_f max_f * W_ih[f] ---
    gx = b_eff
    for f in range(FINAL_EMB):
        feat = jnp.max(conv_all[:, f * GROUP_W:(f + 1) * GROUP_W],
                       axis=1, keepdims=True)                       # aligned 8-lane max
        gx = gx + feat * bs[2 + f:3 + f, :]
    # gx: [T*Bp, 4H] f32 (conv bias already folded into b_eff)

    # --- hoisted activation constants: one tanh pass per step.
    #     sigmoid(x) = 0.5*tanh(0.5*x) + 0.5 on i/f/o lanes, plain tanh on g lanes.
    lane = lax.broadcasted_iota(jnp.int32, (1, 4 * H), 1)
    pre = jnp.where((lane >= 2 * H) & (lane < 3 * H), 1.0, 0.5).astype(jnp.float32)
    post = 1.0 - pre

    # --- LSTM recurrence, fully unrolled; only h @ W_hh.T on the serial path ---
    # TODO(synk): on v5e/v6e, pltpu.matmul_push_rhs could stage W_hh once across the
    # 8 unrolled steps (matmul_acc_lhs/matmul_pop per step); kept as jnp.dot pending
    # a bundle-dump check.
    whh = wslab_ref[WHH_OFF:WHH_OFF + H, :]               # [H, 4H] bf16, resident
    h = st0_ref[0:Bp, :]
    c = st0_ref[Bp:2 * Bp, :]
    outs = []
    for t in range(T):
        gates = gx[t * Bp:(t + 1) * Bp, :] + jnp.dot(      # aligned (8,128) gx tile
            h.astype(jnp.bfloat16), whh, preferred_element_type=jnp.float32)
        y = jnp.tanh(gates * pre)                          # single EUP pass over all gates
        act = y * pre + post                               # VPU fixup -> (i,f,o)=sigmoid, g=tanh
        c = act[:, H:2 * H] * c + act[:, 0:H] * act[:, 2 * H:3 * H]
        h = act[:, 3 * H:4 * H] * jnp.tanh(c)
        outs.append(h)                                     # stays in vregs
    stateN_ref[0:Bp, :] = h
    stateN_ref[Bp:2 * Bp, :] = c

    # --- final Linear: one matmul, lane-dense padded logits store ---
    out_all = jnp.concatenate(outs, axis=0)                # [T*Bp, H] f32 (no VMEM round trip)
    logits_ref[...] = jnp.dot(out_all.astype(jnp.bfloat16),
                              wslab_ref[FCW_OFF:FCW_OFF + H, :],
                              preferred_element_type=jnp.float32) + fc_b


def crnn_fused_call(xcat, wslab, bslab, state0):
    vmem = pl.BlockSpec(memory_space=pltpu.MemorySpace.VMEM)
    return pl.pallas_call(
        _crnn_fused_kernel,
        in_specs=[vmem, vmem, vmem, vmem],
        out_specs=(vmem, vmem),
        out_shape=(
            jax.ShapeDtypeStruct((TIME_STEPS * BPAD, V_PAD), jnp.float32),
            jax.ShapeDtypeStruct((2 * BPAD, HIDDEN), jnp.float32),
        ),
    )(xcat, wslab, bslab, state0)


# ---------------- parameters (deterministic, synthetic; PyTorch layout) ----------------
def init_params(key):
    ks = iter(jax.random.split(key, 32))
    p = {}
    p['char_table'] = 0.1 * jax.random.normal(next(ks), (CHAR_VOCAB + 1, CHAR_EMB), jnp.float32)
    p['char_table'] = p['char_table'].at[CHAR_VOCAB].set(0.0)   # padding_idx row
    p['word_table'] = 0.1 * jax.random.normal(next(ks), (WORD_VOCAB + 1, WORD_EMB), jnp.float32)
    p['word_table'] = p['word_table'].at[WORD_VOCAB].set(0.0)   # padding_idx row
    for k in CHAR_KERNELS:
        p[f'ck_{k}_w'] = 0.3 * jax.random.normal(next(ks), (k, CHAR_EMB), jnp.float32)
        p[f'ck_{k}_b'] = 0.05 * jax.random.normal(next(ks), (1,), jnp.float32)
    for k in WORD_KERNELS:
        p[f'wk_{k}_w'] = 0.3 * jax.random.normal(next(ks), (k, WORD_EMB), jnp.float32)
        p[f'wk_{k}_b'] = 0.05 * jax.random.normal(next(ks), (1,), jnp.float32)
    s = 1.0 / jnp.sqrt(HIDDEN)
    p['w_ih'] = jax.random.uniform(next(ks), (4 * HIDDEN, FINAL_EMB), jnp.float32, -s, s)
    p['w_hh'] = jax.random.uniform(next(ks), (4 * HIDDEN, HIDDEN), jnp.float32, -s, s)
    p['b_ih'] = jax.random.uniform(next(ks), (4 * HIDDEN,), jnp.float32, -s, s)
    p['b_hh'] = jax.random.uniform(next(ks), (4 * HIDDEN,), jnp.float32, -s, s)
    p['fc_w'] = jax.random.uniform(next(ks), (WORD_VOCAB, HIDDEN), jnp.float32, -1.0, 1.0)
    p['fc_b'] = jnp.zeros((WORD_VOCAB,), jnp.float32)
    return p


def _toeplitz_conv_weight(w, L):
    """Conv filter [k, E] -> matrix [L*E, P] so that (x.reshape(L*E) @ M)[p]
    equals the valid cross-correlation at position p."""
    k, E = w.shape
    P = L - k + 1
    m = jnp.zeros((L, E, P), jnp.float32)
    for p in range(P):
        m = m.at[p:p + k, :, p].set(w)
    return m.reshape(L * E, P)


def prepare_params(p):
    """One-time pre-fold of PyTorch-layout params into kernel-ready packed slabs."""
    # conv section: rows 0..175 Toeplitz weights (branch g at lane offset 8*g),
    # row 176 = lane bias hit by the ones-column (-1e30 on unused group lanes).
    conv_sec = jnp.zeros((CONV_ROWS, V_PAD), jnp.float32)
    for g, k in enumerate(CHAR_KERNELS):
        blk = _toeplitz_conv_weight(p[f'ck_{k}_w'], MAX_WORD_LEN)          # [96, P]
        conv_sec = conv_sec.at[0:D_CHAR, g * GROUP_W:g * GROUP_W + blk.shape[1]].set(blk)
    for j, k in enumerate(WORD_KERNELS):
        g = len(CHAR_KERNELS) + j
        blk = _toeplitz_conv_weight(p[f'wk_{k}_w'], WORD_CTX)              # [80, P]
        conv_sec = conv_sec.at[D_CHAR:D_CAT, g * GROUP_W:g * GROUP_W + blk.shape[1]].set(blk)
    lane = jnp.arange(V_PAD)
    pvec = jnp.array(list(CONV_P) + [0] * (V_PAD // GROUP_W - FINAL_EMB), jnp.int32)
    valid = (lane % GROUP_W) < pvec[lane // GROUP_W]
    conv_sec = conv_sec.at[ONES_COL, :].set(jnp.where(valid, 0.0, -1e30))

    whh_t = p['w_hh'].T                                                    # [H, 4H]
    fcw_pad = jnp.zeros((HIDDEN, V_PAD), jnp.float32).at[:, :WORD_VOCAB].set(p['fc_w'].T)
    wslab = jnp.concatenate([conv_sec, whh_t, fcw_pad], axis=0).astype(jnp.bfloat16)

    conv_b = jnp.concatenate([p[f'ck_{k}_b'] for k in CHAR_KERNELS]
                             + [p[f'wk_{k}_b'] for k in WORD_KERNELS])     # [FINAL_EMB]
    w_ih_t = p['w_ih'].T                                                   # [FINAL_EMB, 4H]
    b_eff = p['b_ih'] + p['b_hh'] + conv_b @ w_ih_t                        # exact bias fold
    bslab = jnp.zeros((8, V_PAD), jnp.float32)
    bslab = bslab.at[0, :].set(b_eff)
    bslab = bslab.at[1, :WORD_VOCAB].set(p['fc_b'])
    bslab = bslab.at[2:2 + FINAL_EMB, :].set(w_ih_t)

    return {'char_table': p['char_table'], 'word_table': p['word_table'],
            'wslab': wslab, 'bslab': bslab}


# ---------------- forward (single fused Pallas call) ----------------
def crnn_forward(prep, char_inputs, word_inputs, hidden):
    h0, c0 = hidden                               # each [num_layers, B, H]
    B, T = char_inputs.shape[:2]

    # Embedding gather glue (pure JAX); batch padded to 8 sublanes, ones column
    # appended for the conv lane-bias row, columns padded to XCOLS.
    # TODO(synk): in-kernel gather of the tiny embedding tables would save one HBM
    # hop for xcat, but Mosaic gather lowering is riskier than this XLA fusion.
    ce = prep['char_table'][jnp.swapaxes(char_inputs, 0, 1)].reshape(T, B, D_CHAR)
    we = prep['word_table'][jnp.swapaxes(word_inputs, 0, 1)].reshape(T, B, D_WORD)
    ones = jnp.ones((T, B, 1), jnp.float32)
    x = jnp.concatenate([ce, we, ones], axis=-1)                 # [T, B, D_CAT+1]
    x = jnp.pad(x, ((0, 0), (0, BPAD - B), (0, XCOLS - (D_CAT + 1))))
    xcat = x.reshape(T * BPAD, XCOLS).astype(jnp.bfloat16)       # [T*8, XCOLS]

    state0 = jnp.zeros((2 * BPAD, HIDDEN), jnp.float32)
    state0 = state0.at[0:B].set(h0[0]).at[BPAD:BPAD + B].set(c0[0])

    logits_pad, stateN = crnn_fused_call(xcat, prep['wslab'], prep['bslab'], state0)

    logits = logits_pad.reshape(T, BPAD, V_PAD)[:, :B, :WORD_VOCAB].transpose(1, 0, 2)
    hN = stateN[0:B]
    cN = stateN[BPAD:BPAD + B]
    return logits, (hN[None], cN[None])


# ---------------- pure-JAX reference (for verification) ----------------
def crnn_reference(params, char_inputs, word_inputs, hidden):
    h0, c0 = hidden
    B, T = char_inputs.shape[:2]
    ce = params['char_table'][char_inputs]        # [B,T,Lc,Ec]
    we = params['word_table'][word_inputs]        # [B,T,Lw,Ew]

    feats = []
    for k in CHAR_KERNELS:
        w, b = params[f'ck_{k}_w'], params[f'ck_{k}_b'][0]
        P = MAX_WORD_LEN - k + 1
        conv = jnp.stack([jnp.einsum('btle,le->bt', ce[:, :, p:p + k, :], w)
                          for p in range(P)], axis=-1) + b
        feats.append(jnp.max(conv, axis=-1))
    for k in WORD_KERNELS:
        w, b = params[f'wk_{k}_w'], params[f'wk_{k}_b'][0]
        P = WORD_CTX - k + 1
        conv = jnp.stack([jnp.einsum('btle,le->bt', we[:, :, p:p + k, :], w)
                          for p in range(P)], axis=-1) + b
        feats.append(jnp.max(conv, axis=-1))
    x = jnp.stack(feats, axis=-1)                 # [B, T, F]

    w_ih, w_hh = params['w_ih'], params['w_hh']
    b = params['b_ih'] + params['b_hh']
    H = HIDDEN

    def step(carry, x_t):
        h, c = carry
        gates = x_t @ w_ih.T + h @ w_hh.T + b
        i_g = 1.0 / (1.0 + jnp.exp(-gates[:, 0:H]))
        f_g = 1.0 / (1.0 + jnp.exp(-gates[:, H:2 * H]))
        g_g = jnp.tanh(gates[:, 2 * H:3 * H])
        o_g = 1.0 / (1.0 + jnp.exp(-gates[:, 3 * H:4 * H]))
        c = f_g * c + i_g * g_g
        h = o_g * jnp.tanh(c)
        return (h, c), h

    (hN, cN), outs = lax.scan(step, (h0[0], c0[0]), jnp.swapaxes(x, 0, 1))
    out = jnp.swapaxes(outs, 0, 1)
    logits = out.reshape(B * T, H) @ params['fc_w'].T + params['fc_b']
    return logits.reshape(B, T, WORD_VOCAB), (hN[None], cN[None])


# ---------------- main ----------------
if __name__ == "__main__":
    key = jax.random.PRNGKey(0)
    k_par, k_ci, k_wi = jax.random.split(key, 3)

    params = init_params(k_par)
    prep = prepare_params(params)                 # one-time weight pre-fold/pack

    char_inputs = jax.random.randint(k_ci, (BATCH, TIME_STEPS, MAX_WORD_LEN), 0, CHAR_VOCAB, jnp.int32)
    word_inputs = jax.random.randint(k_wi, (BATCH, TIME_STEPS, WORD_CTX), 0, WORD_VOCAB, jnp.int32)
    # init_hidden() equivalent for LSTM
    h0 = jnp.zeros((NUM_LAYERS, BATCH, HIDDEN), jnp.float32)
    c0 = jnp.zeros((NUM_LAYERS, BATCH, HIDDEN), jnp.float32)

    forward = jax.jit(crnn_forward)
    logits, (hN, cN) = forward(prep, char_inputs, word_inputs, (h0, c0))
    jax.block_until_ready((logits, hN, cN))

    # sanity check against a pure-JAX f32 reference
    ref_logits, (ref_hN, ref_cN) = crnn_reference(params, char_inputs, word_inputs, (h0, c0))
    assert logits.shape == (BATCH, TIME_STEPS, WORD_VOCAB)
    assert hN.shape == (NUM_LAYERS, BATCH, HIDDEN) and cN.shape == (NUM_LAYERS, BATCH, HIDDEN)
    assert jnp.allclose(logits, ref_logits, rtol=1e-2, atol=1e-2)
    assert jnp.allclose(hN, ref_hN, rtol=1e-2, atol=1e-2)
    assert jnp.allclose(cN, ref_cN, rtol=1e-2, atol=1e-2)

    print("KERNEL_OK")
</pallas_src>

<mosaic_0001>
module attributes {stable_mosaic.version = 11 : i64} {
  func.func @_crnn_fused_kernel(%arg0: memref<64x184xbf16, #tpu.memory_space<vmem>>, %arg1: memref<248x128xbf16, #tpu.memory_space<vmem>>, %arg2: memref<8x128xf32, #tpu.memory_space<vmem>>, %arg3: memref<16x32xf32, #tpu.memory_space<vmem>>, %arg4: memref<64x128xf32, #tpu.memory_space<vmem>>, %arg5: memref<16x32xf32, #tpu.memory_space<vmem>>) attributes {dimension_semantics = [], scalar_prefetch = 0 : i64, scratch_operands = 0 : i64, tpu.core_type = #tpu.core_type<tc>} {
    %c0 = arith.constant 0 : index
    %c0_0 = arith.constant 0 : index
    %0 = vector.load %arg2[%c0, %c0_0] : memref<8x128xf32, #tpu.memory_space<vmem>>, vector<8x128xf32>
    %1 = vector.extract_strided_slice %0 {offsets = [0, 0], sizes = [1, 128], strides = [1, 1]} : vector<8x128xf32> to vector<1x128xf32>
    %2 = vector.extract_strided_slice %0 {offsets = [1, 0], sizes = [1, 128], strides = [1, 1]} : vector<8x128xf32> to vector<1x128xf32>
    %c0_1 = arith.constant 0 : index
    %c0_2 = arith.constant 0 : index
    %3 = vector.load %arg0[%c0_1, %c0_2] : memref<64x184xbf16, #tpu.memory_space<vmem>>, vector<64x184xbf16>
    %c0_3 = arith.constant 0 : index
    %c0_4 = arith.constant 0 : index
    %4 = vector.load %arg1[%c0_3, %c0_4] : memref<248x128xbf16, #tpu.memory_space<vmem>>, vector<184x128xbf16>
    %cst = arith.constant dense<0.000000e+00> : vector<64x128xf32>
    %5 = tpu.matmul %3, %4, %cst {dimension_numbers = #tpu.dot_dimension_numbers<[1], [0], [0], [1], [0, 0, 1, 1], [], []>} : vector<64x184xbf16>, vector<184x128xbf16>, vector<64x128xf32> -> vector<64x128xf32>
    %6 = vector.extract_strided_slice %5 {offsets = [0, 0], sizes = [64, 8], strides = [1, 1]} : vector<64x128xf32> to vector<64x8xf32>
    %cst_5 = arith.constant dense<0xFF800000> : vector<64xf32>
    %7 = vector.multi_reduction <maximumf>, %6, %cst_5 [1] : vector<64x8xf32> to vector<64xf32>
    %8 = vector.shape_cast %7 : vector<64xf32> to vector<64x1xf32>
    %9 = vector.extract_strided_slice %0 {offsets = [2, 0], sizes = [1, 128], strides = [1, 1]} : vector<8x128xf32> to vector<1x128xf32>
    %10 = vector.broadcast %8 : vector<64x1xf32> to vector<64x128xf32>
    %11 = vector.broadcast %9 : vector<1x128xf32> to vector<64x128xf32>
    %12 = arith.mulf %10, %11 : vector<64x128xf32>
    %13 = vector.broadcast %1 : vector<1x128xf32> to vector<64x128xf32>
    %14 = arith.addf %13, %12 : vector<64x128xf32>
    %15 = vector.extract_strided_slice %5 {offsets = [0, 8], sizes = [64, 8], strides = [1, 1]} : vector<64x128xf32> to vector<64x8xf32>
    %cst_6 = arith.constant dense<0xFF800000> : vector<64xf32>
    %16 = vector.multi_reduction <maximumf>, %15, %cst_6 [1] : vector<64x8xf32> to vector<64xf32>
    %17 = vector.shape_cast %16 : vector<64xf32> to vector<64x1xf32>
    %18 = vector.extract_strided_slice %0 {offsets = [3, 0], sizes = [1, 128], strides = [1, 1]} : vector<8x128xf32> to vector<1x128xf32>
    %19 = vector.broadcast %17 : vector<64x1xf32> to vector<64x128xf32>
    %20 = vector.broadcast %18 : vector<1x128xf32> to vector<64x128xf32>
    %21 = arith.mulf %19, %20 : vector<64x128xf32>
    %22 = arith.addf %14, %21 : vector<64x128xf32>
    %23 = vector.extract_strided_slice %5 {offsets = [0, 16], sizes = [64, 8], strides = [1, 1]} : vector<64x128xf32> to vector<64x8xf32>
    %cst_7 = arith.constant dense<0xFF800000> : vector<64xf32>
    %24 = vector.multi_reduction <maximumf>, %23, %cst_7 [1] : vector<64x8xf32> to vector<64xf32>
    %25 = vector.shape_cast %24 : vector<64xf32> to vector<64x1xf32>
    %26 = vector.extract_strided_slice %0 {offsets = [4, 0], sizes = [1, 128], strides = [1, 1]} : vector<8x128xf32> to vector<1x128xf32>
    %27 = vector.broadcast %25 : vector<64x1xf32> to vector<64x128xf32>
    %28 = vector.broadcast %26 : vector<1x128xf32> to vector<64x128xf32>
    %29 = arith.mulf %27, %28 : vector<64x128xf32>
    %30 = arith.addf %22, %29 : vector<64x128xf32>
    %31 = vector.extract_strided_slice %5 {offsets = [0, 24], sizes = [64, 8], strides = [1, 1]} : vector<64x128xf32> to vector<64x8xf32>
    %cst_8 = arith.constant dense<0xFF800000> : vector<64xf32>
    %32 = vector.multi_reduction <maximumf>, %31, %cst_8 [1] : vector<64x8xf32> to vector<64xf32>
    %33 = vector.shape_cast %32 : vector<64xf32> to vector<64x1xf32>
    %34 = vector.extract_strided_slice %0 {offsets = [5, 0], sizes = [1, 128], strides = [1, 1]} : vector<8x128xf32> to vector<1x128xf32>
    %35 = vector.broadcast %33 : vector<64x1xf32> to vector<64x128xf32>
    %36 = vector.broadcast %34 : vector<1x128xf32> to vector<64x128xf32>
    %37 = arith.mulf %35, %36 : vector<64x128xf32>
    %38 = arith.addf %30, %37 : vector<64x128xf32>
    %39 = tpu.iota {dimensions = array<i32: 1>} : vector<1x128xi32>
    %c64_i32 = arith.constant 64 : i32
    %40 = vector.broadcast %c64_i32 : i32 to vector<1x128xi32>
    %41 = arith.cmpi sge, %39, %40 : vector<1x128xi32>
    %c96_i32 = arith.constant 96 : i32
    %42 = vector.broadcast %c96_i32 : i32 to vector<1x128xi32>
    %43 = arith.cmpi slt, %39, %42 : vector<1x128xi32>
    %44 = arith.andi %41, %43 : vector<1x128xi1>
    %cst_9 = arith.constant 1.000000e+00 : f32
    %cst_10 = arith.constant 5.000000e-01 : f32
    %45 = vector.broadcast %cst_9 : f32 to vector<1x128xf32>
    %46 = vector.broadcast %cst_10 : f32 to vector<1x128xf32>
    %47 = arith.select %44, %45, %46 : vector<1x128xi1>, vector<1x128xf32>
    %cst_11 = arith.constant 1.000000e+00 : f32
    %48 = vector.broadcast %cst_11 : f32 to vector<1x128xf32>
    %49 = arith.subf %48, %47 : vector<1x128xf32>
    %c184 = arith.constant 184 : index
    %c0_12 = arith.constant 0 : index
    %50 = vector.load %arg1[%c184, %c0_12] : memref<248x128xbf16, #tpu.memory_space<vmem>>, vector<32x128xbf16>
    %c0_13 = arith.constant 0 : index
    %c0_14 = arith.constant 0 : index
    %51 = vector.load %arg3[%c0_13, %c0_14] : memref<16x32xf32, #tpu.memory_space<vmem>>, vector<8x32xf32>
    %c8 = arith.constant 8 : index
    %c0_15 = arith.constant 0 : index
    %52 = vector.load %arg3[%c8, %c0_15] : memref<16x32xf32, #tpu.memory_space<vmem>>, vector<8x32xf32>
    %53 = vector.extract_strided_slice %38 {offsets = [0, 0], sizes = [8, 128], strides = [1, 1]} : vector<64x128xf32> to vector<8x128xf32>
    %54 = arith.truncf %51 : vector<8x32xf32> to vector<8x32xbf16>
    %cst_16 = arith.constant dense<0.000000e+00> : vector<8x128xf32>
    %55 = tpu.matmul %54, %50, %cst_16 {dimension_numbers = #tpu.dot_dimension_numbers<[1], [0], [0], [1], [0, 0, 1, 1], [], []>} : vector<8x32xbf16>, vector<32x128xbf16>, vector<8x128xf32> -> vector<8x128xf32>
    %56 = arith.addf %53, %55 : vector<8x128xf32>
    %57 = vector.broadcast %47 : vector<1x128xf32> to vector<8x128xf32>
    %58 = arith.mulf %56, %57 : vector<8x128xf32>
    %59 = math.tanh %58 : vector<8x128xf32>
    %60 = vector.broadcast %47 : vector<1x128xf32> to vector<8x128xf32>
    %61 = arith.mulf %59, %60 : vector<8x128xf32>
    %62 = vector.broadcast %49 : vector<1x128xf32> to vector<8x128xf32>
    %63 = arith.addf %61, %62 : vector<8x128xf32>
    %64 = vector.extract_strided_slice %63 {offsets = [0, 32], sizes = [8, 32], strides = [1, 1]} : vector<8x128xf32> to vector<8x32xf32>
    %65 = arith.mulf %64, %52 : vector<8x32xf32>
    %66 = vector.extract_strided_slice %63 {offsets = [0, 0], sizes = [8, 32], strides = [1, 1]} : vector<8x128xf32> to vector<8x32xf32>
    %67 = vector.extract_strided_slice %63 {offsets = [0, 64], sizes = [8, 32], strides = [1, 1]} : vector<8x128xf32> to vector<8x32xf32>
    %68 = arith.mulf %66, %67 : vector<8x32xf32>
    %69 = arith.addf %65, %68 : vector<8x32xf32>
    %70 = vector.extract_strided_slice %63 {offsets = [0, 96], sizes = [8, 32], strides = [1, 1]} : vector<8x128xf32> to vector<8x32xf32>
    %71 = math.tanh %69 : vector<8x32xf32>
    %72 = arith.mulf %70, %71 : vector<8x32xf32>
    %73 = vector.extract_strided_slice %38 {offsets = [8, 0], sizes = [8, 128], strides = [1, 1]} : vector<64x128xf32> to vector<8x128xf32>
    %74 = arith.truncf %72 : vector<8x32xf32> to vector<8x32xbf16>
    %cst_17 = arith.constant dense<0.000000e+00> : vector<8x128xf32>
    %75 = tpu.matmul %74, %50, %cst_17 {dimension_numbers = #tpu.dot_dimension_numbers<[1], [0], [0], [1], [0, 0, 1, 1], [], []>} : vector<8x32xbf16>, vector<32x128xbf16>, vector<8x128xf32> -> vector<8x128xf32>
    %76 = arith.addf %73, %75 : vector<8x128xf32>
    %77 = vector.broadcast %47 : vector<1x128xf32> to vector<8x128xf32>
    %78 = arith.mulf %76, %77 : vector<8x128xf32>
    %79 = math.tanh %78 : vector<8x128xf32>
    %80 = vector.broadcast %47 : vector<1x128xf32> to vector<8x128xf32>
    %81 = arith.mulf %79, %80 : vector<8x128xf32>
    %82 = vector.broadcast %49 : vector<1x128xf32> to vector<8x128xf32>
    %83 = arith.addf %81, %82 : vector<8x128xf32>
    %84 = vector.extract_strided_slice %83 {offsets = [0, 32], sizes = [8, 32], strides = [1, 1]} : vector<8x128xf32> to vector<8x32xf32>
    %85 = arith.mulf %84, %69 : vector<8x32xf32>
    %86 = vector.extract_strided_slice %83 {offsets = [0, 0], sizes = [8, 32], strides = [1, 1]} : vector<8x128xf32> to vector<8x32xf32>
    %87 = vector.extract_strided_slice %83 {offsets = [0, 64], sizes = [8, 32], strides = [1, 1]} : vector<8x128xf32> to vector<8x32xf32>
    %88 = arith.mulf %86, %87 : vector<8x32xf32>
    %89 = arith.addf %85, %88 : vector<8x32xf32>
    %90 = vector.extract_strided_slice %83 {offsets = [0, 96], sizes = [8, 32], strides = [1, 1]} : vector<8x128xf32> to vector<8x32xf32>
    %91 = math.tanh %89 : vector<8x32xf32>
    %92 = arith.mulf %90, %91 : vector<8x32xf32>
    %93 = vector.extract_strided_slice %38 {offsets = [16, 0], sizes = [8, 128], strides = [1, 1]} : vector<64x128xf32> to vector<8x128xf32>
    %94 = arith.truncf %92 : vector<8x32xf32> to vector<8x32xbf16>
    %cst_18 = arith.constant dense<0.000000e+00> : vector<8x128xf32>
    %95 = tpu.matmul %94, %50, %cst_18 {dimension_numbers = #tpu.dot_dimension_numbers<[1], [0], [0], [1], [0, 0, 1, 1], [], []>} : vector<8x32xbf16>, vector<32x128xbf16>, vector<8x128xf32> -> vector<8x128xf32>
    %96 = arith.addf %93, %95 : vector<8x128xf32>
    %97 = vector.broadcast %47 : vector<1x128xf32> to vector<8x128xf32>
    %98 = arith.mulf %96, %97 : vector<8x128xf32>
    %99 = math.tanh %98 : vector<8x128xf32>
    %100 = vector.broadcast %47 : vector<1x128xf32> to vector<8x128xf32>
    %101 = arith.mulf %99, %100 : vector<8x128xf32>
    %102 = vector.broadcast %49 : vector<1x128xf32> to vector<8x128xf32>
    %103 = arith.addf %101, %102 : vector<8x128xf32>
    %104 = vector.extract_strided_slice %103 {offsets = [0, 32], sizes = [8, 32], strides = [1, 1]} : vector<8x128xf32> to vector<8x32xf32>
    %105 = arith.mulf %104, %89 : vector<8x32xf32>
    %106 = vector.extract_strided_slice %103 {offsets = [0, 0], sizes = [8, 32], strides = [1, 1]} : vector<8x128xf32> to vector<8x32xf32>
    %107 = vector.extract_strided_slice %103 {offsets = [0, 64], sizes = [8, 32], strides = [1, 1]} : vector<8x128xf32> to vector<8x32xf32>
    %108 = arith.mulf %106, %107 : vector<8x32xf32>
    %109 = arith.addf %105, %108 : vector<8x32xf32>
    %110 = vector.extract_strided_slice %103 {offsets = [0, 96], sizes = [8, 32], strides = [1, 1]} : vector<8x128xf32> to vector<8x32xf32>
    %111 = math.tanh %109 : vector<8x32xf32>
    %112 = arith.mulf %110, %111 : vector<8x32xf32>
    %113 = vector.extract_strided_slice %38 {offsets = [24, 0], sizes = [8, 128], strides = [1, 1]} : vector<64x128xf32> to vector<8x128xf32>
    %114 = arith.truncf %112 : vector<8x32xf32> to vector<8x32xbf16>
    %cst_19 = arith.constant dense<0.000000e+00> : vector<8x128xf32>
    %115 = tpu.matmul %114, %50, %cst_19 {dimension_numbers = #tpu.dot_dimension_numbers<[1], [0], [0], [1], [0, 0, 1, 1], [], []>} : vector<8x32xbf16>, vector<32x128xbf16>, vector<8x128xf32> -> vector<8x128xf32>
    %116 = arith.addf %113, %115 : vector<8x128xf32>
    %117 = vector.broadcast %47 : vector<1x128xf32> to vector<8x128xf32>
    %118 = arith.mulf %116, %117 : vector<8x128xf32>
    %119 = math.tanh %118 : vector<8x128xf32>
    %120 = vector.broadcast %47 : vector<1x128xf32> to vector<8x128xf32>
    %121 = arith.mulf %119, %120 : vector<8x128xf32>
    %122 = vector.broadcast %49 : vector<1x128xf32> to vector<8x128xf32>
    %123 = arith.addf %121, %122 : vector<8x128xf32>
    %124 = vector.extract_strided_slice %123 {offsets = [0, 32], sizes = [8, 32], strides = [1, 1]} : vector<8x128xf32> to vector<8x32xf32>
    %125 = arith.mulf %124, %109 : vector<8x32xf32>
    %126 = vector.extract_strided_slice %123 {offsets = [0, 0], sizes = [8, 32], strides = [1, 1]} : vector<8x128xf32> to vector<8x32xf32>
    %127 = vector.extract_strided_slice %123 {offsets = [0, 64], sizes = [8, 32], strides = [1, 1]} : vector<8x128xf32> to vector<8x32xf32>
    %128 = arith.mulf %126, %127 : vector<8x32xf32>
    %129 = arith.addf %125, %128 : vector<8x32xf32>
    %130 = vector.extract_strided_slice %123 {offsets = [0, 96], sizes = [8, 32], strides = [1, 1]} : vector<8x128xf32> to vector<8x32xf32>
    %131 = math.tanh %129 : vector<8x32xf32>
    %132 = arith.mulf %130, %131 : vector<8x32xf32>
    %133 = vector.extract_strided_slice %38 {offsets = [32, 0], sizes = [8, 128], strides = [1, 1]} : vector<64x128xf32> to vector<8x128xf32>
    %134 = arith.truncf %132 : vector<8x32xf32> to vector<8x32xbf16>
    %cst_20 = arith.constant dense<0.000000e+00> : vector<8x128xf32>
    %135 = tpu.matmul %134, %50, %cst_20 {dimension_numbers = #tpu.dot_dimension_numbers<[1], [0], [0], [1], [0, 0, 1, 1], [], []>} : vector<8x32xbf16>, vector<32x128xbf16>, vector<8x128xf32> -> vector<8x128xf32>
    %136 = arith.addf %133, %135 : vector<8x128xf32>
    %137 = vector.broadcast %47 : vector<1x128xf32> to vector<8x128xf32>
    %138 = arith.mulf %136, %137 : vector<8x128xf32>
    %139 = math.tanh %138 : vector<8x128xf32>
    %140 = vector.broadcast %47 : vector<1x128xf32> to vector<8x128xf32>
    %141 = arith.mulf %139, %140 : vector<8x128xf32>
    %142 = vector.broadcast %49 : vector<1x128xf32> to vector<8x128xf32>
    %143 = arith.addf %141, %142 : vector<8x128xf32>
    %144 = vector.extract_strided_slice %143 {offsets = [0, 32], sizes = [8, 32], strides = [1, 1]} : vector<8x128xf32> to vector<8x32xf32>
    %145 = arith.mulf %144, %129 : vector<8x32xf32>
    %146 = vector.extract_strided_slice %143 {offsets = [0, 0], sizes = [8, 32], strides = [1, 1]} : vector<8x128xf32> to vector<8x32xf32>
    %147 = vector.extract_strided_slice %143 {offsets = [0, 64], sizes = [8, 32], strides = [1, 1]} : vector<8x128xf32> to vector<8x32xf32>
    %148 = arith.mulf %146, %147 : vector<8x32xf32>
    %149 = arith.addf %145, %148 : vector<8x32xf32>
    %150 = vector.extract_strided_slice %143 {offsets = [0, 96], sizes = [8, 32], strides = [1, 1]} : vector<8x128xf32> to vector<8x32xf32>
    %151 = math.tanh %149 : vector<8x32xf32>
    %152 = arith.mulf %150, %151 : vector<8x32xf32>
    %153 = vector.extract_strided_slice %38 {offsets = [40, 0], sizes = [8, 128], strides = [1, 1]} : vector<64x128xf32> to vector<8x128xf32>
    %154 = arith.truncf %152 : vector<8x32xf32> to vector<8x32xbf16>
    %cst_21 = arith.constant dense<0.000000e+00> : vector<8x128xf32>
    %155 = tpu.matmul %154, %50, %cst_21 {dimension_numbers = #tpu.dot_dimension_numbers<[1], [0], [0], [1], [0, 0, 1, 1], [], []>} : vector<8x32xbf16>, vector<32x128xbf16>, vector<8x128xf32> -> vector<8x128xf32>
    %156 = arith.addf %153, %155 : vector<8x128xf32>
    %157 = vector.broadcast %47 : vector<1x128xf32> to vector<8x128xf32>
    %158 = arith.mulf %156, %157 : vector<8x128xf32>
    %159 = math.tanh %158 : vector<8x128xf32>
    %160 = vector.broadcast %47 : vector<1x128xf32> to vector<8x128xf32>
    %161 = arith.mulf %159, %160 : vector<8x128xf32>
    %162 = vector.broadcast %49 : vector<1x128xf32> to vector<8x128xf32>
    %163 = arith.addf %161, %162 : vector<8x128xf32>
    %164 = vector.extract_strided_slice %163 {offsets = [0, 32], sizes = [8, 32], strides = [1, 1]} : vector<8x128xf32> to vector<8x32xf32>
    %165 = arith.mulf %164, %149 : vector<8x32xf32>
    %166 = vector.extract_strided_slice %163 {offsets = [0, 0], sizes = [8, 32], strides = [1, 1]} : vector<8x128xf32> to vector<8x32xf32>
    %167 = vector.extract_strided_slice %163 {offsets = [0, 64], sizes = [8, 32], strides = [1, 1]} : vector<8x128xf32> to vector<8x32xf32>
    %168 = arith.mulf %166, %167 : vector<8x32xf32>
    %169 = arith.addf %165, %168 : vector<8x32xf32>
    %170 = vector.extract_strided_slice %163 {offsets = [0, 96], sizes = [8, 32], strides = [1, 1]} : vector<8x128xf32> to vector<8x32xf32>
    %171 = math.tanh %169 : vector<8x32xf32>
    %172 = arith.mulf %170, %171 : vector<8x32xf32>
    %173 = vector.extract_strided_slice %38 {offsets = [48, 0], sizes = [8, 128], strides = [1, 1]} : vector<64x128xf32> to vector<8x128xf32>
    %174 = arith.truncf %172 : vector<8x32xf32> to vector<8x32xbf16>
    %cst_22 = arith.constant dense<0.000000e+00> : vector<8x128xf32>
    %175 = tpu.matmul %174, %50, %cst_22 {dimension_numbers = #tpu.dot_dimension_numbers<[1], [0], [0], [1], [0, 0, 1, 1], [], []>} : vector<8x32xbf16>, vector<32x128xbf16>, vector<8x128xf32> -> vector<8x128xf32>
    %176 = arith.addf %173, %175 : vector<8x128xf32>
    %177 = vector.broadcast %47 : vector<1x128xf32> to vector<8x128xf32>
    %178 = arith.mulf %176, %177 : vector<8x128xf32>
    %179 = math.tanh %178 : vector<8x128xf32>
    %180 = vector.broadcast %47 : vector<1x128xf32> to vector<8x128xf32>
    %181 = arith.mulf %179, %180 : vector<8x128xf32>
    %182 = vector.broadcast %49 : vector<1x128xf32> to vector<8x128xf32>
    %183 = arith.addf %181, %182 : vector<8x128xf32>
    %184 = vector.extract_strided_slice %183 {offsets = [0, 32], sizes = [8, 32], strides = [1, 1]} : vector<8x128xf32> to vector<8x32xf32>
    %185 = arith.mulf %184, %169 : vector<8x32xf32>
    %186 = vector.extract_strided_slice %183 {offsets = [0, 0], sizes = [8, 32], strides = [1, 1]} : vector<8x128xf32> to vector<8x32xf32>
    %187 = vector.extract_strided_slice %183 {offsets = [0, 64], sizes = [8, 32], strides = [1, 1]} : vector<8x128xf32> to vector<8x32xf32>
    %188 = arith.mulf %186, %187 : vector<8x32xf32>
    %189 = arith.addf %185, %188 : vector<8x32xf32>
    %190 = vector.extract_strided_slice %183 {offsets = [0, 96], sizes = [8, 32], strides = [1, 1]} : vector<8x128xf32> to vector<8x32xf32>
    %191 = math.tanh %189 : vector<8x32xf32>
    %192 = arith.mulf %190, %191 : vector<8x32xf32>
    %193 = vector.extract_strided_slice %38 {offsets = [56, 0], sizes = [8, 128], strides = [1, 1]} : vector<64x128xf32> to vector<8x128xf32>
    %194 = arith.truncf %192 : vector<8x32xf32> to vector<8x32xbf16>
    %cst_23 = arith.constant dense<0.000000e+00> : vector<8x128xf32>
    %195 = tpu.matmul %194, %50, %cst_23 {dimension_numbers = #tpu.dot_dimension_numbers<[1], [0], [0], [1], [0, 0, 1, 1], [], []>} : vector<8x32xbf16>, vector<32x128xbf16>, vector<8x128xf32> -> vector<8x128xf32>
    %196 = arith.addf %193, %195 : vector<8x128xf32>
    %197 = vector.broadcast %47 : vector<1x128xf32> to vector<8x128xf32>
    %198 = arith.mulf %196, %197 : vector<8x128xf32>
    %199 = math.tanh %198 : vector<8x128xf32>
    %200 = vector.broadcast %47 : vector<1x128xf32> to vector<8x128xf32>
    %201 = arith.mulf %199, %200 : vector<8x128xf32>
    %202 = vector.broadcast %49 : vector<1x128xf32> to vector<8x128xf32>
    %203 = arith.addf %201, %202 : vector<8x128xf32>
    %204 = vector.extract_strided_slice %203 {offsets = [0, 32], sizes = [8, 32], strides = [1, 1]} : vector<8x128xf32> to vector<8x32xf32>
    %205 = arith.mulf %204, %189 : vector<8x32xf32>
    %206 = vector.extract_strided_slice %203 {offsets = [0, 0], sizes = [8, 32], strides = [1, 1]} : vector<8x128xf32> to vector<8x32xf32>
    %207 = vector.extract_strided_slice %203 {offsets = [0, 64], sizes = [8, 32], strides = [1, 1]} : vector<8x128xf32> to vector<8x32xf32>
    %208 = arith.mulf %206, %207 : vector<8x32xf32>
    %209 = arith.addf %205, %208 : vector<8x32xf32>
    %210 = vector.extract_strided_slice %203 {offsets = [0, 96], sizes = [8, 32], strides = [1, 1]} : vector<8x128xf32> to vector<8x32xf32>
    %211 = math.tanh %209 : vector<8x32xf32>
    %212 = arith.mulf %210, %211 : vector<8x32xf32>
    %c0_24 = arith.constant 0 : index
    %c0_25 = arith.constant 0 : index
    %213 = vector.load %arg5[%c0_24, %c0_25] : memref<16x32xf32, #tpu.memory_space<vmem>>, vector<8x32xf32>
    tpu.vector_store %arg5[%c0_24, %c0_25], %212 {strides = array<i32>} : memref<16x32xf32, #tpu.memory_space<vmem>>, vector<8x32xf32>,
    %c8_26 = arith.constant 8 : index
    %c0_27 = arith.constant 0 : index
    %214 = vector.load %arg5[%c8_26, %c0_27] : memref<16x32xf32, #tpu.memory_space<vmem>>, vector<8x32xf32>
    tpu.vector_store %arg5[%c8_26, %c0_27], %209 {strides = array<i32>} : memref<16x32xf32, #tpu.memory_space<vmem>>, vector<8x32xf32>,
    %215 = tpu.concatenate %72, %92, %112, %132, %152, %172, %192, %212 in 0 : vector<8x32xf32>, vector<8x32xf32>, vector<8x32xf32>, vector<8x32xf32>, vector<8x32xf32>, vector<8x32xf32>, vector<8x32xf32>, vector<8x32xf32> -> vector<64x32xf32>
    %216 = arith.truncf %215 : vector<64x32xf32> to vector<64x32xbf16>
    %c216 = arith.constant 216 : index
    %c0_28 = arith.constant 0 : index
    %217 = vector.load %arg1[%c216, %c0_28] : memref<248x128xbf16, #tpu.memory_space<vmem>>, vector<32x128xbf16>
    %cst_29 = arith.constant dense<0.000000e+00> : vector<64x128xf32>
    %218 = tpu.matmul %216, %217, %cst_29 {dimension_numbers = #tpu.dot_dimension_numbers<[1], [0], [0], [1], [0, 0, 1, 1], [], []>} : vector<64x32xbf16>, vector<32x128xbf16>, vector<64x128xf32> -> vector<64x128xf32>
    %219 = vector.broadcast %2 : vector<1x128xf32> to vector<64x128xf32>
    %220 = arith.addf %218, %219 : vector<64x128xf32>
    %c0_30 = arith.constant 0 : index
    %c0_31 = arith.constant 0 : index
    %221 = vector.load %arg4[%c0_30, %c0_31] : memref<64x128xf32, #tpu.memory_space<vmem>>, vector<64x128xf32>
    tpu.vector_store %arg4[%c0_30, %c0_31], %220 {strides = array<i32>} : memref<64x128xf32, #tpu.memory_space<vmem>>, vector<64x128xf32>,
    return
  }
}

</mosaic_0001>

<llo_original>
// kernel: crnn_forward.1
$region0: #{crnn_forward.1}
  #allocation0 [shape = 'u32[]', space=smem, size = 0x4, offset = 0x4, fixed_abs, tag = 'smem constant byte address 0x4 - core index']
  #allocation1 [shape = 'u32[144,128]{1,0:T(1,128)}', space=vmem, size = 0x12000, scoped, tag = 'internal scratch']
  %s0 = inlined_call_operand.vmem [shape: bf16[64,184], index: 0, kind: input, shape index: {}]
  %s1 = inlined_call_operand.vmem [shape: bf16[248,128], index: 1, kind: input, shape index: {}]
  %s2 = inlined_call_operand.vmem [shape: f32[8,128], index: 2, kind: input, shape index: {}]
  %s3 = inlined_call_operand.vmem [shape: f32[16,32], index: 3, kind: input, shape index: {}]
  %s4 = inlined_call_operand.vmem [shape: f32[64,128], index: 4, kind: output, shape index: {0}]
  %s5 = inlined_call_operand.vmem [shape: f32[16,32], index: 5, kind: output, shape index: {1}]
  %6 = xla_tuple %s4, %s5
  %s7 = sld [smem:[#allocation0]]
  $region34: #{crnn_forward.1} parent=0
    _
  %s9 = ssub.s32 1, %s7
  %s10 = scalar_select 0, %s9, %s7
  // Predicated region
  $region2: #{crnn_forward.1} parent=0 // pred_check
    _
  $region3: #{crnn_forward.1} parent=0 // pred_check_branch
    %12 = sbr.rel (0) target = $region5
  $region4: #{crnn_forward.1} parent=0 // pred_region
    _
  $region5: #{crnn_forward.1} parent=0 // pred_fallthru
    _
  // Predicated region
  $region6: #{crnn_forward.1} parent=0 // pred_check
    _
  $region7: #{crnn_forward.1} parent=0 // pred_check_branch
    %14 = sbr.rel (0) target = $region9
  $region8: #{crnn_forward.1} parent=0 // pred_region
    _
  $region9: #{crnn_forward.1} parent=0 // pred_fallthru
    _
  // Predicated region
  $region10: #{crnn_forward.1} parent=0 // pred_check
    _
  $region11: #{crnn_forward.1} parent=0 // pred_check_branch
    %16 = sbr.rel (0) target = $region13
  $region12: #{crnn_forward.1} parent=0 // pred_region
    _
  $region13: #{crnn_forward.1} parent=0 // pred_fallthru
    _
  // Predicated region
  $region14: #{crnn_forward.1} parent=0 // pred_check
    _
  $region15: #{crnn_forward.1} parent=0 // pred_check_branch
    %18 = sbr.rel (0) target = $region17
  $region16: #{crnn_forward.1} parent=0 // pred_region
    _
  $region17: #{crnn_forward.1} parent=0 // pred_fallthru
    _
  %v20 = vld [vmem:[%s2] sm:$0xff]
  %v21 = vld [vmem:[%s0] sm:$0xff]
  %v22 = vld [vmem:[%s0 + $0x8] sm:$0xff]
  %v23 = vld [vmem:[%s0 + $0x10] sm:$0xff]
  %v24 = vld [vmem:[%s0 + $0x18] sm:$0xff]
  %v25 = vld [vmem:[%s0 + $0x20] sm:$0xff]
  %v26 = vld [vmem:[%s0 + $0x28] sm:$0xff]
  %v27 = vld [vmem:[%s0 + $0x30] sm:$0xff]
  %v28 = vld [vmem:[%s0 + $0x38] sm:$0xff]
  %v29 = vld [vmem:[%s1] sm:$0xf]
  %v30 = vld [vmem:[%s1 + $0x4] sm:$0xf]
  %v31 = vld [vmem:[%s1 + $0x8] sm:$0xf]
  %v32 = vld [vmem:[%s1 + $0xc] sm:$0xf]
  %v33 = vld [vmem:[%s1 + $0x10] sm:$0xf]
  %v34 = vld [vmem:[%s1 + $0x14] sm:$0xf]
  %v35 = vld [vmem:[%s1 + $0x18] sm:$0xf]
  %v36 = vld [vmem:[%s1 + $0x1c] sm:$0xf]
  %v37 = vld [vmem:[%s1 + $0x20] sm:$0xf]
  %v38 = vld [vmem:[%s1 + $0x24] sm:$0xf]
  %v39 = vld [vmem:[%s1 + $0x28] sm:$0xf]
  %v40 = vld [vmem:[%s1 + $0x2c] sm:$0xf]
  %v41 = vld [vmem:[%s1 + $0x30] sm:$0xf]
  %v42 = vld [vmem:[%s1 + $0x34] sm:$0xf]
  %v43 = vld [vmem:[%s1 + $0x38] sm:$0xf]
  %v44 = vld [vmem:[%s1 + $0x3c] sm:$0xf]
  %v45 = vld [vmem:[%s1 + $0x40] sm:$0xf]
  %v46 = vld [vmem:[%s1 + $0x44] sm:$0xf]
  %v47 = vld [vmem:[%s1 + $0x48] sm:$0xf]
  %v48 = vld [vmem:[%s1 + $0x4c] sm:$0xf]
  %v49 = vld [vmem:[%s1 + $0x50] sm:$0xf]
  %v50 = vld [vmem:[%s1 + $0x54] sm:$0xf]
  %v51 = vld [vmem:[%s1 + $0x58] sm:$0xf]
  %v60 = vunpack.c.l.b16 %v21
  %v61 = vunpack.c.h.b16 %v21
  %v62 = vunpack.c.l.b16 %v22
  %v63 = vunpack.c.h.b16 %v22
  %v64 = vunpack.c.l.b16 %v23
  %v65 = vunpack.c.h.b16 %v23
  %v66 = vunpack.c.l.b16 %v24
  %v67 = vunpack.c.h.b16 %v24
  %v68 = vunpack.c.l.b16 %v25
  %v69 = vunpack.c.h.b16 %v25
  %v70 = vunpack.c.l.b16 %v26
  %v71 = vunpack.c.h.b16 %v26
  %v72 = vunpack.c.l.b16 %v27
  %v73 = vunpack.c.h.b16 %v27
  %v74 = vunpack.c.l.b16 %v28
  %v75 = vunpack.c.h.b16 %v28
  %v76 = vpack.c.b16 %v62, %v60
  %v77 = vpack.c.b16 %v63, %v61
  %v78 = vpack.c.b16 %v66, %v64
  %v79 = vpack.c.b16 %v67, %v65
  %v80 = vpack.c.b16 %v70, %v68
  %v81 = vpack.c.b16 %v71, %v69
  %v82 = vpack.c.b16 %v74, %v72
  %v83 = vpack.c.b16 %v75, %v73
  %v111 = vunpack.c.l.b16 %v29
  %v112 = vunpack.c.l.b16 %v30
  %v113 = vunpack.c.l.b16 %v31
  %v114 = vunpack.c.l.b16 %v32
  %v115 = vunpack.c.l.b16 %v33
  %v116 = vunpack.c.l.b16 %v34
  %v117 = vunpack.c.l.b16 %v35
  %v118 = vunpack.c.l.b16 %v36
  %v119 = vunpack.c.l.b16 %v37
  %v120 = vunpack.c.l.b16 %v38
  %v121 = vunpack.c.l.b16 %v39
  %v122 = vunpack.c.l.b16 %v40
  %v123 = vunpack.c.l.b16 %v41
  %v124 = vunpack.c.l.b16 %v42
  %v125 = vunpack.c.l.b16 %v43
  %v126 = vunpack.c.l.b16 %v44
  %v127 = vunpack.c.l.b16 %v45
  %v128 = vunpack.c.l.b16 %v46
  %v129 = vunpack.c.l.b16 %v47
  %v130 = vunpack.c.l.b16 %v48
  %v131 = vunpack.c.l.b16 %v49
  %v132 = vunpack.c.l.b16 %v50
  %v133 = vunpack.c.l.b16 %v51
  %v134 = vpack.c.b16 %v112, %v111
  %v135 = vpack.c.b16 %v114, %v113
  %v136 = vpack.c.b16 %v116, %v115
  %v137 = vpack.c.b16 %v118, %v117
  %v138 = vpack.c.b16 %v120, %v119
  %v139 = vpack.c.b16 %v122, %v121
  %v140 = vpack.c.b16 %v124, %v123
  %v141 = vpack.c.b16 %v126, %v125
  %v142 = vpack.c.b16 %v128, %v127
  %v143 = vpack.c.b16 %v130, %v129
  %v144 = vpack.c.b16 %v132, %v131
  %v145 = vpack.c.b16 %v133, %v133
  %vm157 = vcmask 457728
  %v159 = vsel %vm157, %v77, 0
  %v162 = vsel %vm157, %v79, 0
  %v165 = vsel %vm157, %v81, 0
  %v168 = vsel %vm157, %v83, 0
  %vm170 = vcmask 1043456
  %v172 = vsel %vm170, %v145, 0
  %174 = vmatprep.subr.bf16.mxu0 0
  %175 = vmatpush1.bf16.msra.mxu0 %v141
  %176 = vmatprep.subr.bf16.mxu0 0
  %177 = vmatpush1.bf16.msra.mxu0 %v140
  %178 = vmatprep.subr.bf16.mxu0 0
  %179 = vmatpush1.bf16.msra.mxu0 %v139
  %180 = vmatprep.subr.bf16.mxu0 0
  %181 = vmatpush1.bf16.msra.mxu0 %v138
  %182 = vmatprep.subr.bf16.mxu0 0
  %183 = vmatpush1.bf16.msra.mxu0 %v137
  %184 = vmatprep.subr.bf16.mxu0 0
  %185 = vmatpush1.bf16.msra.mxu0 %v136
  %186 = vmatprep.subr.bf16.mxu0 0
  %187 = vmatpush1.bf16.msra.mxu0 %v135
  %188 = vmatprep.subr.bf16.mxu0 0
  %189 = vmatpush1.bf16.msra.mxu0 %v134
  %190 = vmatprep.subr.bf16.mxu0 0
  %191 = vmatpush2.bf16.msra.mxu0 0
  %192 = vmatprep.subr.bf16.mxu0 0
  %193 = vmatpush2.bf16.msra.mxu0 0
  %194 = vmatprep.subr.bf16.mxu0 0
  %195 = vmatpush2.bf16.msra.mxu0 0
  %196 = vmatprep.subr.bf16.mxu0 0
  %197 = vmatpush2.bf16.msra.mxu0 0
  %198 = vmatprep.subr.bf16.mxu0 0
  %199 = vmatpush2.bf16.msra.mxu0 %v172
  %200 = vmatprep.subr.bf16.mxu0 0
  %201 = vmatpush2.bf16.msra.mxu0 %v144
  %202 = vmatprep.subr.bf16.mxu0 0
  %203 = vmatpush2.bf16.msra.mxu0 %v143
  %204 = vmatprep.subr.bf16.mxu0 0
  %205 = vmatpush2.bf16.msra.mxu0 %v142
  %206 = vmatprep.mubr.bf16.mxu0 %v159
  %207 = vmatmul.mubr.bf16.gmra.mxu0 %v76
  %v208 = vpop.f32.mrf.mxu0
  %v209 = vadd.f32 0.0, %v208
  %v210 = vpop.f32.mrf.mxu0
  %v211 = vpop.f32.mrf.mxu0
  %v212 = vadd.f32 0.0, %v211
  %v213 = vpop.f32.mrf.mxu0
  %214 = vmatprep.mubr.bf16.mxu0 %v162
  %215 = vmatmul.mubr.bf16.gmra.mxu0 %v78
  %v216 = vpop.f32.mrf.mxu0
  %v217 = vadd.f32 0.0, %v216
  %v218 = vpop.f32.mrf.mxu0
  %v219 = vpop.f32.mrf.mxu0
  %v220 = vadd.f32 0.0, %v219
  %v221 = vpop.f32.mrf.mxu0
  %222 = vmatprep.mubr.bf16.mxu0 %v165
  %223 = vmatmul.mubr.bf16.gmra.mxu0 %v80
  %v224 = vpop.f32.mrf.mxu0
  %v225 = vadd.f32 0.0, %v224
  %v226 = vpop.f32.mrf.mxu0
  %v227 = vpop.f32.mrf.mxu0
  %v228 = vadd.f32 0.0, %v227
  %v229 = vpop.f32.mrf.mxu0
  %230 = vmatprep.mubr.bf16.mxu0 %v168
  %231 = vmatmul.mubr.bf16.gmra.mxu0 %v82
  %v232 = vpop.f32.mrf.mxu0
  %v233 = vadd.f32 0.0, %v232
  %v234 = vpop.f32.mrf.mxu0
  %v235 = vpop.f32.mrf.mxu0
  %v236 = vadd.f32 0.0, %v235
  %v237 = vpop.f32.mrf.mxu0
  %238 = vdwg.mxu0
  %vm239 = vcmask 64512
  %v240 = vsel %vm239, %v209, -inf
  %241 = vmax.xlane.f32.xlu0 %v240
  %v242 = vpop.xlane.xlu0 %241
  %v243 = vsel %vm239, %v212, -inf
  %244 = vmax.xlane.f32.xlu0 %v243
  %v245 = vpop.xlane.xlu0 %244
  %v246 = vsel %vm239, %v217, -inf
  %247 = vmax.xlane.f32.xlu0 %v246
  %v248 = vpop.xlane.xlu0 %247
  %v249 = vsel %vm239, %v220, -inf
  %250 = vmax.xlane.f32.xlu0 %v249
  %v251 = vpop.xlane.xlu0 %250
  %v252 = vsel %vm239, %v225, -inf
  %253 = vmax.xlane.f32.xlu0 %v252
  %v254 = vpop.xlane.xlu0 %253
  %v255 = vsel %vm239, %v228, -inf
  %256 = vmax.xlane.f32.xlu0 %v255
  %v257 = vpop.xlane.xlu0 %256
  %v258 = vsel %vm239, %v233, -inf
  %259 = vmax.xlane.f32.xlu0 %v258
  %v260 = vpop.xlane.xlu0 %259
  %v261 = vsel %vm239, %v236, -inf
  %262 = vmax.xlane.f32.xlu0 %v261
  %v263 = vpop.xlane.xlu0 %262
  %v264 = vlaneseq
  %v265 = vshrl.u32 %v264, 7
  %v266 = vsub.s32 2, %v265
  %v267 = vrot.slane %v20, %v266
  %v268 = vmul.f32 %v242, %v267
  %v269 = vmul.f32 %v245, %v267
  %v270 = vmul.f32 %v248, %v267
  %v271 = vmul.f32 %v251, %v267
  %v272 = vmul.f32 %v254, %v267
  %v273 = vmul.f32 %v257, %v267
  %v274 = vmul.f32 %v260, %v267
  %v275 = vmul.f32 %v263, %v267
  %v276 = vlaneseq
  %v277 = vshrl.u32 %v276, 7
  %v278 = vsub.s32 0, %v277
  %v279 = vrot.slane %v20, %v278
  %v280 = vadd.f32 %v279, %v268
  %v281 = vadd.f32 %v279, %v269
  %v282 = vadd.f32 %v279, %v270
  %v283 = vadd.f32 %v279, %v271
  %v284 = vadd.f32 %v279, %v272
  %v285 = vadd.f32 %v279, %v273
  %v286 = vadd.f32 %v279, %v274
  %v287 = vadd.f32 %v279, %v275
  %vm288 = vcmask 130112
  %v289 = vsel %vm288, %v209, -inf
  %290 = vmax.xlane.f32.xlu0 %v289
  %v291 = vpop.xlane.xlu0 %290
  %v292 = vsel %vm288, %v212, -inf
  %293 = vmax.xlane.f32.xlu0 %v292
  %v294 = vpop.xlane.xlu0 %293
  %v295 = vsel %vm288, %v217, -inf
  %296 = vmax.xlane.f32.xlu0 %v295
  %v297 = vpop.xlane.xlu0 %296
  %v298 = vsel %vm288, %v220, -inf
  %299 = vmax.xlane.f32.xlu0 %v298
  %v300 = vpop.xlane.xlu0 %299
  %v301 = vsel %vm288, %v225, -inf
  %302 = vmax.xlane.f32.xlu0 %v301
  %v303 = vpop.xlane.xlu0 %302
  %v304 = vsel %vm288, %v228, -inf
  %305 = vmax.xlane.f32.xlu0 %v304
  %v306 = vpop.xlane.xlu0 %305
  %v307 = vsel %vm288, %v233, -inf
  %308 = vmax.xlane.f32.xlu0 %v307
  %v309 = vpop.xlane.xlu0 %308
  %v310 = vsel %vm288, %v236, -inf
  %311 = vmax.xlane.f32.xlu0 %v310
  %v312 = vpop.xlane.xlu0 %311
  %v313 = vlaneseq
  %v314 = vshrl.u32 %v313, 7
  %v315 = vsub.s32 3, %v314
  %v316 = vrot.slane %v20, %v315
  %v317 = vmul.f32 %v291, %v316
  %v318 = vmul.f32 %v294, %v316
  %v319 = vmul.f32 %v297, %v316
  %v320 = vmul.f32 %v300, %v316
  %v321 = vmul.f32 %v303, %v316
  %v322 = vmul.f32 %v306, %v316
  %v323 = vmul.f32 %v309, %v316
  %v324 = vmul.f32 %v312, %v316
  %v325 = vadd.f32 %v280, %v317
  %v326 = vadd.f32 %v281, %v318
  %v327 = vadd.f32 %v282, %v319
  %v328 = vadd.f32 %v283, %v320
  %v329 = vadd.f32 %v284, %v321
  %v330 = vadd.f32 %v285, %v322
  %v331 = vadd.f32 %v286, %v323
  %v332 = vadd.f32 %v287, %v324
  %vm333 = vcmask 195712
  %v334 = vsel %vm333, %v209, -inf
  %335 = vmax.xlane.f32.xlu0 %v334
  %v336 = vpop.xlane.xlu0 %335
  %v337 = vsel %vm333, %v212, -inf
  %338 = vmax.xlane.f32.xlu0 %v337
  %v339 = vpop.xlane.xlu0 %338
  %v340 = vsel %vm333, %v217, -inf
  %341 = vmax.xlane.f32.xlu0 %v340
  %v342 = vpop.xlane.xlu0 %341
  %v343 = vsel %vm333, %v220, -inf
  %344 = vmax.xlane.f32.xlu0 %v343
  %v345 = vpop.xlane.xlu0 %344
  %v346 = vsel %vm333, %v225, -inf
  %347 = vmax.xlane.f32.xlu0 %v346
  %v348 = vpop.xlane.xlu0 %347
  %v349 = vsel %vm333, %v228, -inf
  %350 = vmax.xlane.f32.xlu0 %v349
  %v351 = vpop.xlane.xlu0 %350
  %v352 = vsel %vm333, %v233, -inf
  %353 = vmax.xlane.f32.xlu0 %v352
  %v354 = vpop.xlane.xlu0 %353
  %v355 = vsel %vm333, %v236, -inf
  %356 = vmax.xlane.f32.xlu0 %v355
  %v357 = vpop.xlane.xlu0 %356
  %v358 = vlaneseq
  %v359 = vshrl.u32 %v358, 7
  %v360 = vsub.s32 4, %v359
  %v361 = vrot.slane %v20, %v360
  %v362 = vmul.f32 %v336, %v361
  %v363 = vmul.f32 %v339, %v361
  %v364 = vmul.f32 %v342, %v361
  %v365 = vmul.f32 %v345, %v361
  %v366 = vmul.f32 %v348, %v361
  %v367 = vmul.f32 %v351, %v361
  %v368 = vmul.f32 %v354, %v361
  %v369 = vmul.f32 %v357, %v361
  %v370 = vadd.f32 %v325, %v362
  %v371 = vadd.f32 %v326, %v363
  %v372 = vadd.f32 %v327, %v364
  %v373 = vadd.f32 %v328, %v365
  %v374 = vadd.f32 %v329, %v366
  %v375 = vadd.f32 %v330, %v367
  %v376 = vadd.f32 %v331, %v368
  %v377 = vadd.f32 %v332, %v369
  %vm378 = vcmask 261312
  %v379 = vsel %vm378, %v209, -inf
  %380 = vmax.xlane.f32.xlu0 %v379
  %v381 = vpop.xlane.xlu0 %380
  %v382 = vsel %vm378, %v212, -inf
  %383 = vmax.xlane.f32.xlu0 %v382
  %v384 = vpop.xlane.xlu0 %383
  %v385 = vsel %vm378, %v217, -inf
  %386 = vmax.xlane.f32.xlu0 %v385
  %v387 = vpop.xlane.xlu0 %386
  %v388 = vsel %vm378, %v220, -inf
  %389 = vmax.xlane.f32.xlu0 %v388
  %v390 = vpop.xlane.xlu0 %389
  %v391 = vsel %vm378, %v225, -inf
  %392 = vmax.xlane.f32.xlu0 %v391
  %v393 = vpop.xlane.xlu0 %392
  %v394 = vsel %vm378, %v228, -inf
  %395 = vmax.xlane.f32.xlu0 %v394
  %v396 = vpop.xlane.xlu0 %395
  %v397 = vsel %vm378, %v233, -inf
  %398 = vmax.xlane.f32.xlu0 %v397
  %v399 = vpop.xlane.xlu0 %398
  %v400 = vsel %vm378, %v236, -inf
  %401 = vmax.xlane.f32.xlu0 %v400
  %v402 = vpop.xlane.xlu0 %401
  %v403 = vlaneseq
  %v404 = vshrl.u32 %v403, 7
  %v405 = vsub.s32 5, %v404
  %v406 = vrot.slane %v20, %v405
  %v407 = vmul.f32 %v381, %v406
  %v408 = vmul.f32 %v384, %v406
  %v409 = vmul.f32 %v387, %v406
  %v410 = vmul.f32 %v390, %v406
  %v411 = vmul.f32 %v393, %v406
  %v412 = vmul.f32 %v396, %v406
  %v413 = vmul.f32 %v399, %v406
  %v414 = vmul.f32 %v402, %v406
  %v415 = vadd.f32 %v370, %v407
  %v416 = vadd.f32 %v371, %v408
  %v417 = vadd.f32 %v372, %v409
  %v418 = vadd.f32 %v373, %v410
  %v419 = vadd.f32 %v374, %v411
  %v420 = vadd.f32 %v375, %v412
  %v421 = vadd.f32 %v376, %v413
  %v422 = vadd.f32 %v377, %v414
  %v423 = vlaneseq
  %v424 = vand.u32 %v423, 127
  %vm425 = vcmp.ge.s32.totalorder %v424, 64
  %vm426 = vcmp.lt.s32.totalorder %v424, 96
  %vm427 = vmand %vm425, %vm426
  %v428 = vsel %vm427, 1.0, 0.5
  %v429 = vsub.f32 1.0, %v428
  %v430 = vld [vmem:[%s1 + $0x5c] sm:$0xf]
  %v431 = vld [vmem:[%s1 + $0x60] sm:$0xf]
  %v432 = vld [vmem:[%s1 + $0x64] sm:$0xf]
  %v433 = vld [vmem:[%s1 + $0x68] sm:$0xf]
  %v434 = vld [vmem:[%s3] sm:$0xff]
  %v435 = vld [vmem:[%s3 + $0x8] sm:$0xff]
  %v436 = vpack.c.bf16 %v434, %v434
  %v441 = vunpack.c.l.b16 %v430
  %v442 = vunpack.c.l.b16 %v431
  %v443 = vunpack.c.l.b16 %v432
  %v444 = vunpack.c.l.b16 %v433
  %v445 = vpack.c.b16 %v442, %v441
  %v446 = vpack.c.b16 %v444, %v443
  %vm449 = vcmask 261120
  %v451 = vsel %vm449, %v436, 0
  %453 = vmatprep.subr.bf16.mxu0 0
  %454 = vmatpush1.bf16.msra.mxu0 0
  %455 = vmatprep.subr.bf16.mxu0 0
  %456 = vmatpush1.bf16.msra.mxu0 0
  %457 = vmatprep.subr.bf16.mxu0 0
  %458 = vmatpush1.bf16.msra.mxu0 0
  %459 = vmatprep.subr.bf16.mxu0 0
  %460 = vmatpush1.bf16.msra.mxu0 0
  %461 = vmatprep.subr.bf16.mxu0 0
  %462 = vmatpush1.bf16.msra.mxu0 0
  %463 = vmatprep.subr.bf16.mxu0 0
  %464 = vmatpush1.bf16.msra.mxu0 0
  %465 = vmatprep.subr.bf16.mxu0 0
  %466 = vmatpush1.bf16.msra.mxu0 %v446
  %467 = vmatprep.subr.bf16.mxu0 0
  %468 = vmatpush1.bf16.msra.mxu0 %v445
  %469 = vmatprep.subr.bf16.mxu0 0
  %470 = vmatpush2.bf16.msra.mxu0 0
  %471 = vmatprep.subr.bf16.mxu0 0
  %472 = vmatpush2.bf16.msra.mxu0 0
  %473 = vmatprep.subr.bf16.mxu0 0
  %474 = vmatpush2.bf16.msra.mxu0 0
  %475 = vmatprep.subr.bf16.mxu0 0
  %476 = vmatpush2.bf16.msra.mxu0 0
  %477 = vmatprep.subr.bf16.mxu0 0
  %478 = vmatpush2.bf16.msra.mxu0 0
  %479 = vmatprep.subr.bf16.mxu0 0
  %480 = vmatpush2.bf16.msra.mxu0 0
  %481 = vmatprep.subr.bf16.mxu0 0
  %482 = vmatpush2.bf16.msra.mxu0 0
  %483 = vmatprep.subr.bf16.mxu0 0
  %484 = vmatpush2.bf16.msra.mxu0 0
  %485 = vmatprep.mubr.bf16.mxu0 0
  %486 = vmatmul.mubr.bf16.gmra.mxu0 %v451
  %v487 = vpop.f32.mrf.mxu0
  %v488 = vadd.f32 0.0, %v487
  %v489 = vpop.f32.mrf.mxu0
  %v490 = vpop.f32.mrf.mxu0
  %v491 = vpop.f32.mrf.mxu0
  %492 = vdwg.mxu0
  %v493 = vadd.f32 %v415, %v488
  %v494 = vmul.f32 %v493, %v428
  %v495 = vtanh.pop %v494
  %v496 = vmul.f32 %v495, %v428
  %v497 = vadd.f32 %v496, %v429
  %499 = vrot.lane.b32.xlu0 %v435, 32
  %v500 = vpop.permute.xlu0 %499
  %v502 = vmul.f32 %v497, %v500
  %504 = vrot.lane.b32.xlu0 %v497, 64
  %v505 = vpop.permute.xlu0 %504
  %v507 = vmul.f32 %v497, %v505
  %509 = vrot.lane.b32.xlu0 %v507, 32
  %v510 = vpop.permute.xlu0 %509
  %v512 = vadd.f32 %v502, %v510
  %v513 = vtanh.pop %v512
  %515 = vrot.lane.b32.xlu0 %v513, 64
  %v516 = vpop.permute.xlu0 %515
  %v518 = vmul.f32 %v497, %v516
  %v519 = vpack.c.bf16 %v518, %v518
  %521 = vrot.lane.b32.xlu0 %v519, 32
  %v522 = vpop.permute.xlu0 %521
  %v524 = vsel %vm449, %v522, 0
  %526 = vmatprep.subr.bf16.mxu0 0
  %527 = vmatpush1.bf16.msra.mxu0 0
  %528 = vmatprep.subr.bf16.mxu0 0
  %529 = vmatpush1.bf16.msra.mxu0 0
  %530 = vmatprep.subr.bf16.mxu0 0
  %531 = vmatpush1.bf16.msra.mxu0 0
  %532 = vmatprep.subr.bf16.mxu0 0
  %533 = vmatpush1.bf16.msra.mxu0 0
  %534 = vmatprep.subr.bf16.mxu0 0
  %535 = vmatpush1.bf16.msra.mxu0 0
  %536 = vmatprep.subr.bf16.mxu0 0
  %537 = vmatpush1.bf16.msra.mxu0 0
  %538 = vmatprep.subr.bf16.mxu0 0
  %539 = vmatpush1.bf16.msra.mxu0 %v446
  %540 = vmatprep.subr.bf16.mxu0 0
  %541 = vmatpush1.bf16.msra.mxu0 %v445
  %542 = vmatprep.subr.bf16.mxu0 0
  %543 = vmatpush2.bf16.msra.mxu0 0
  %544 = vmatprep.subr.bf16.mxu0 0
  %545 = vmatpush2.bf16.msra.mxu0 0
  %546 = vmatprep.subr.bf16.mxu0 0
  %547 = vmatpush2.bf16.msra.mxu0 0
  %548 = vmatprep.subr.bf16.mxu0 0
  %549 = vmatpush2.bf16.msra.mxu0 0
  %550 = vmatprep.subr.bf16.mxu0 0
  %551 = vmatpush2.bf16.msra.mxu0 0
  %552 = vmatprep.subr.bf16.mxu0 0
  %553 = vmatpush2.bf16.msra.mxu0 0
  %554 = vmatprep.subr.bf16.mxu0 0
  %555 = vmatpush2.bf16.msra.mxu0 0
  %556 = vmatprep.subr.bf16.mxu0 0
  %557 = vmatpush2.bf16.msra.mxu0 0
  %558 = vmatprep.mubr.bf16.mxu0 0
  %559 = vmatmul.mubr.bf16.gmra.mxu0 %v524
  %v560 = vpop.f32.mrf.mxu0
  %v561 = vadd.f32 0.0, %v560
  %v562 = vpop.f32.mrf.mxu0
  %v563 = vpop.f32.mrf.mxu0
  %v564 = vpop.f32.mrf.mxu0
  %565 = vdwg.mxu0
  %v566 = vadd.f32 %v416, %v561
  %v567 = vmul.f32 %v566, %v428
  %v568 = vtanh.pop %v567
  %v569 = vmul.f32 %v568, %v428
  %v570 = vadd.f32 %v569, %v429
  %v571 = vmul.f32 %v570, %v512
  %573 = vrot.lane.b32.xlu0 %v570, 64
  %v574 = vpop.permute.xlu0 %573
  %v576 = vmul.f32 %v570, %v574
  %578 = vrot.lane.b32.xlu0 %v576, 32
  %v579 = vpop.permute.xlu0 %578
  %v581 = vadd.f32 %v571, %v579
  %v582 = vtanh.pop %v581
  %584 = vrot.lane.b32.xlu0 %v582, 64
  %v585 = vpop.permute.xlu0 %584
  %v587 = vmul.f32 %v570, %v585
  %v588 = vpack.c.bf16 %v587, %v587
  %590 = vrot.lane.b32.xlu0 %v588, 32
  %v591 = vpop.permute.xlu0 %590
  %v593 = vsel %vm449, %v591, 0
  %595 = vmatprep.subr.bf16.mxu0 0
  %596 = vmatpush1.bf16.msra.mxu0 0
  %597 = vmatprep.subr.bf16.mxu0 0
  %598 = vmatpush1.bf16.msra.mxu0 0
  %599 = vmatprep.subr.bf16.mxu0 0
  %600 = vmatpush1.bf16.msra.mxu0 0
  %601 = vmatprep.subr.bf16.mxu0 0
  %602 = vmatpush1.bf16.msra.mxu0 0
  %603 = vmatprep.subr.bf16.mxu0 0
  %604 = vmatpush1.bf16.msra.mxu0 0
  %605 = vmatprep.subr.bf16.mxu0 0
  %606 = vmatpush1.bf16.msra.mxu0 0
  %607 = vmatprep.subr.bf16.mxu0 0
  %608 = vmatpush1.bf16.msra.mxu0 %v446
  %609 = vmatprep.subr.bf16.mxu0 0
  %610 = vmatpush1.bf16.msra.mxu0 %v445
  %611 = vmatprep.subr.bf16.mxu0 0
  %612 = vmatpush2.bf16.msra.mxu0 0
  %613 = vmatprep.subr.bf16.mxu0 0
  %614 = vmatpush2.bf16.msra.mxu0 0
  %615 = vmatprep.subr.bf16.mxu0 0
  %616 = vmatpush2.bf16.msra.mxu0 0
  %617 = vmatprep.subr.bf16.mxu0 0
  %618 = vmatpush2.bf16.msra.mxu0 0
  %619 = vmatprep.subr.bf16.mxu0 0
  %620 = vmatpush2.bf16.msra.mxu0 0
  %621 = vmatprep.subr.bf16.mxu0 0
  %622 = vmatpush2.bf16.msra.mxu0 0
  %623 = vmatprep.subr.bf16.mxu0 0
  %624 = vmatpush2.bf16.msra.mxu0 0
  %625 = vmatprep.subr.bf16.mxu0 0
  %626 = vmatpush2.bf16.msra.mxu0 0
  %627 = vmatprep.mubr.bf16.mxu0 0
  %628 = vmatmul.mubr.bf16.gmra.mxu0 %v593
  %v629 = vpop.f32.mrf.mxu0
  %v630 = vadd.f32 0.0, %v629
  %v631 = vpop.f32.mrf.mxu0
  %v632 = vpop.f32.mrf.mxu0
  %v633 = vpop.f32.mrf.mxu0
  %634 = vdwg.mxu0
  %v635 = vadd.f32 %v417, %v630
  %v636 = vmul.f32 %v635, %v428
  %v637 = vtanh.pop %v636
  %v638 = vmul.f32 %v637, %v428
  %v639 = vadd.f32 %v638, %v429
  %v640 = vmul.f32 %v639, %v581
  %642 = vrot.lane.b32.xlu0 %v639, 64
  %v643 = vpop.permute.xlu0 %642
  %v645 = vmul.f32 %v639, %v643
  %647 = vrot.lane.b32.xlu0 %v645, 32
  %v648 = vpop.permute.xlu0 %647
  %v650 = vadd.f32 %v640, %v648
  %v651 = vtanh.pop %v650
  %653 = vrot.lane.b32.xlu0 %v651, 64
  %v654 = vpop.permute.xlu0 %653
  %v656 = vmul.f32 %v639, %v654
  %v657 = vpack.c.bf16 %v656, %v656
  %659 = vrot.lane.b32.xlu0 %v657, 32
  %v660 = vpop.permute.xlu0 %659
  %v662 = vsel %vm449, %v660, 0
  %664 = vmatprep.subr.bf16.mxu0 0
  %665 = vmatpush1.bf16.msra.mxu0 0
  %666 = vmatprep.subr.bf16.mxu0 0
  %667 = vmatpush1.bf16.msra.mxu0 0
  %668 = vmatprep.subr.bf16.mxu0 0
  %669 = vmatpush1.bf16.msra.mxu0 0
  %670 = vmatprep.subr.bf16.mxu0 0
  %671 = vmatpush1.bf16.msra.mxu0 0
  %672 = vmatprep.subr.bf16.mxu0 0
  %673 = vmatpush1.bf16.msra.mxu0 0
  %674 = vmatprep.subr.bf16.mxu0 0
  %675 = vmatpush1.bf16.msra.mxu0 0
  %676 = vmatprep.subr.bf16.mxu0 0
  %677 = vmatpush1.bf16.msra.mxu0 %v446
  %678 = vmatprep.subr.bf16.mxu0 0
  %679 = vmatpush1.bf16.msra.mxu0 %v445
  %680 = vmatprep.subr.bf16.mxu0 0
  %681 = vmatpush2.bf16.msra.mxu0 0
  %682 = vmatprep.subr.bf16.mxu0 0
  %683 = vmatpush2.bf16.msra.mxu0 0
  %684 = vmatprep.subr.bf16.mxu0 0
  %685 = vmatpush2.bf16.msra.mxu0 0
  %686 = vmatprep.subr.bf16.mxu0 0
  %687 = vmatpush2.bf16.msra.mxu0 0
  %688 = vmatprep.subr.bf16.mxu0 0
  %689 = vmatpush2.bf16.msra.mxu0 0
  %690 = vmatprep.subr.bf16.mxu0 0
  %691 = vmatpush2.bf16.msra.mxu0 0
  %692 = vmatprep.subr.bf16.mxu0 0
  %693 = vmatpush2.bf16.msra.mxu0 0
  %694 = vmatprep.subr.bf16.mxu0 0
  %695 = vmatpush2.bf16.msra.mxu0 0
  %696 = vmatprep.mubr.bf16.mxu0 0
  %697 = vmatmul.mubr.bf16.gmra.mxu0 %v662
  %v698 = vpop.f32.mrf.mxu0
  %v699 = vadd.f32 0.0, %v698
  %v700 = vpop.f32.mrf.mxu0
  %v701 = vpop.f32.mrf.mxu0
  %v702 = vpop.f32.mrf.mxu0
  %703 = vdwg.mxu0
  %v704 = vadd.f32 %v418, %v699
  %v705 = vmul.f32 %v704, %v428
  %v706 = vtanh.pop %v705
  %v707 = vmul.f32 %v706, %v428
  %v708 = vadd.f32 %v707, %v429
  %v709 = vmul.f32 %v708, %v650
  %711 = vrot.lane.b32.xlu0 %v708, 64
  %v712 = vpop.permute.xlu0 %711
  %v714 = vmul.f32 %v708, %v712
  %716 = vrot.lane.b32.xlu0 %v714, 32
  %v717 = vpop.permute.xlu0 %716
  %v719 = vadd.f32 %v709, %v717
  %v720 = vtanh.pop %v719
  %722 = vrot.lane.b32.xlu0 %v720, 64
  %v723 = vpop.permute.xlu0 %722
  %v725 = vmul.f32 %v708, %v723
  %v726 = vpack.c.bf16 %v725, %v725
  %728 = vrot.lane.b32.xlu0 %v726, 32
  %v729 = vpop.permute.xlu0 %728
  %v731 = vsel %vm449, %v729, 0
  %733 = vmatprep.subr.bf16.mxu0 0
  %734 = vmatpush1.bf16.msra.mxu0 0
  %735 = vmatprep.subr.bf16.mxu0 0
  %736 = vmatpush1.bf16.msra.mxu0 0
  %737 = vmatprep.subr.bf16.mxu0 0
  %738 = vmatpush1.bf16.msra.mxu0 0
  %739 = vmatprep.subr.bf16.mxu0 0
  %740 = vmatpush1.bf16.msra.mxu0 0
  %741 = vmatprep.subr.bf16.mxu0 0
  %742 = vmatpush1.bf16.msra.mxu0 0
  %743 = vmatprep.subr.bf16.mxu0 0
  %744 = vmatpush1.bf16.msra.mxu0 0
  %745 = vmatprep.subr.bf16.mxu0 0
  %746 = vmatpush1.bf16.msra.mxu0 %v446
  %747 = vmatprep.subr.bf16.mxu0 0
  %748 = vmatpush1.bf16.msra.mxu0 %v445
  %749 = vmatprep.subr.bf16.mxu0 0
  %750 = vmatpush2.bf16.msra.mxu0 0
  %751 = vmatprep.subr.bf16.mxu0 0
  %752 = vmatpush2.bf16.msra.mxu0 0
  %753 = vmatprep.subr.bf16.mxu0 0
  %754 = vmatpush2.bf16.msra.mxu0 0
  %755 = vmatprep.subr.bf16.mxu0 0
  %756 = vmatpush2.bf16.msra.mxu0 0
  %757 = vmatprep.subr.bf16.mxu0 0
  %758 = vmatpush2.bf16.msra.mxu0 0
  %759 = vmatprep.subr.bf16.mxu0 0
  %760 = vmatpush2.bf16.msra.mxu0 0
  %761 = vmatprep.subr.bf16.mxu0 0
  %762 = vmatpush2.bf16.msra.mxu0 0
  %763 = vmatprep.subr.bf16.mxu0 0
  %764 = vmatpush2.bf16.msra.mxu0 0
  %765 = vmatprep.mubr.bf16.mxu0 0
  %766 = vmatmul.mubr.bf16.gmra.mxu0 %v731
  %v767 = vpop.f32.mrf.mxu0
  %v768 = vadd.f32 0.0, %v767
  %v769 = vpop.f32.mrf.mxu0
  %v770 = vpop.f32.mrf.mxu0
  %v771 = vpop.f32.mrf.mxu0
  %772 = vdwg.mxu0
  %v773 = vadd.f32 %v419, %v768
  %v774 = vmul.f32 %v773, %v428
  %v775 = vtanh.pop %v774
  %v776 = vmul.f32 %v775, %v428
  %v777 = vadd.f32 %v776, %v429
  %v778 = vmul.f32 %v777, %v719
  %780 = vrot.lane.b32.xlu0 %v777, 64
  %v781 = vpop.permute.xlu0 %780
  %v783 = vmul.f32 %v777, %v781
  %785 = vrot.lane.b32.xlu0 %v783, 32
  %v786 = vpop.permute.xlu0 %785
  %v788 = vadd.f32 %v778, %v786
  %v789 = vtanh.pop %v788
  %791 = vrot.lane.b32.xlu0 %v789, 64
  %v792 = vpop.permute.xlu0 %791
  %v794 = vmul.f32 %v777, %v792
  %v795 = vpack.c.bf16 %v794, %v794
  %797 = vrot.lane.b32.xlu0 %v795, 32
  %v798 = vpop.permute.xlu0 %797
  %v800 = vsel %vm449, %v798, 0
  %802 = vmatprep.subr.bf16.mxu0 0
  %803 = vmatpush1.bf16.msra.mxu0 0
  %804 = vmatprep.subr.bf16.mxu0 0
  %805 = vmatpush1.bf16.msra.mxu0 0
  %806 = vmatprep.subr.bf16.mxu0 0
  %807 = vmatpush1.bf16.msra.mxu0 0
  %808 = vmatprep.subr.bf16.mxu0 0
  %809 = vmatpush1.bf16.msra.mxu0 0
  %810 = vmatprep.subr.bf16.mxu0 0
  %811 = vmatpush1.bf16.msra.mxu0 0
  %812 = vmatprep.subr.bf16.mxu0 0
  %813 = vmatpush1.bf16.msra.mxu0 0
  %814 = vmatprep.subr.bf16.mxu0 0
  %815 = vmatpush1.bf16.msra.mxu0 %v446
  %816 = vmatprep.subr.bf16.mxu0 0
  %817 = vmatpush1.bf16.msra.mxu0 %v445
  %818 = vmatprep.subr.bf16.mxu0 0
  %819 = vmatpush2.bf16.msra.mxu0 0
  %820 = vmatprep.subr.bf16.mxu0 0
  %821 = vmatpush2.bf16.msra.mxu0 0
  %822 = vmatprep.subr.bf16.mxu0 0
  %823 = vmatpush2.bf16.msra.mxu0 0
  %824 = vmatprep.subr.bf16.mxu0 0
  %825 = vmatpush2.bf16.msra.mxu0 0
  %826 = vmatprep.subr.bf16.mxu0 0
  %827 = vmatpush2.bf16.msra.mxu0 0
  %828 = vmatprep.subr.bf16.mxu0 0
  %829 = vmatpush2.bf16.msra.mxu0 0
  %830 = vmatprep.subr.bf16.mxu0 0
  %831 = vmatpush2.bf16.msra.mxu0 0
  %832 = vmatprep.subr.bf16.mxu0 0
  %833 = vmatpush2.bf16.msra.mxu0 0
  %834 = vmatprep.mubr.bf16.mxu0 0
  %835 = vmatmul.mubr.bf16.gmra.mxu0 %v800
  %v836 = vpop.f32.mrf.mxu0
  %v837 = vadd.f32 0.0, %v836
  %v838 = vpop.f32.mrf.mxu0
  %v839 = vpop.f32.mrf.mxu0
  %v840 = vpop.f32.mrf.mxu0
  %841 = vdwg.mxu0
  %v842 = vadd.f32 %v420, %v837
  %v843 = vmul.f32 %v842, %v428
  %v844 = vtanh.pop %v843
  %v845 = vmul.f32 %v844, %v428
  %v846 = vadd.f32 %v845, %v429
  %v847 = vmul.f32 %v846, %v788
  %849 = vrot.lane.b32.xlu0 %v846, 64
  %v850 = vpop.permute.xlu0 %849
  %v852 = vmul.f32 %v846, %v850
  %854 = vrot.lane.b32.xlu0 %v852, 32
  %v855 = vpop.permute.xlu0 %854
  %v857 = vadd.f32 %v847, %v855
  %v858 = vtanh.pop %v857
  %860 = vrot.lane.b32.xlu0 %v858, 64
  %v861 = vpop.permute.xlu0 %860
  %v863 = vmul.f32 %v846, %v861
  %v864 = vpack.c.bf16 %v863, %v863
  %866 = vrot.lane.b32.xlu0 %v864, 32
  %v867 = vpop.permute.xlu0 %866
  %v869 = vsel %vm449, %v867, 0
  %871 = vmatprep.subr.bf16.mxu0 0
  %872 = vmatpush1.bf16.msra.mxu0 0
  %873 = vmatprep.subr.bf16.mxu0 0
  %874 = vmatpush1.bf16.msra.mxu0 0
  %875 = vmatprep.subr.bf16.mxu0 0
  %876 = vmatpush1.bf16.msra.mxu0 0
  %877 = vmatprep.subr.bf16.mxu0 0
  %878 = vmatpush1.bf16.msra.mxu0 0
  %879 = vmatprep.subr.bf16.mxu0 0
  %880 = vmatpush1.bf16.msra.mxu0 0
  %881 = vmatprep.subr.bf16.mxu0 0
  %882 = vmatpush1.bf16.msra.mxu0 0
  %883 = vmatprep.subr.bf16.mxu0 0
  %884 = vmatpush1.bf16.msra.mxu0 %v446
  %885 = vmatprep.subr.bf16.mxu0 0
  %886 = vmatpush1.bf16.msra.mxu0 %v445
  %887 = vmatprep.subr.bf16.mxu0 0
  %888 = vmatpush2.bf16.msra.mxu0 0
  %889 = vmatprep.subr.bf16.mxu0 0
  %890 = vmatpush2.bf16.msra.mxu0 0
  %891 = vmatprep.subr.bf16.mxu0 0
  %892 = vmatpush2.bf16.msra.mxu0 0
  %893 = vmatprep.subr.bf16.mxu0 0
  %894 = vmatpush2.bf16.msra.mxu0 0
  %895 = vmatprep.subr.bf16.mxu0 0
  %896 = vmatpush2.bf16.msra.mxu0 0
  %897 = vmatprep.subr.bf16.mxu0 0
  %898 = vmatpush2.bf16.msra.mxu0 0
  %899 = vmatprep.subr.bf16.mxu0 0
  %900 = vmatpush2.bf16.msra.mxu0 0
  %901 = vmatprep.subr.bf16.mxu0 0
  %902 = vmatpush2.bf16.msra.mxu0 0
  %903 = vmatprep.mubr.bf16.mxu0 0
  %904 = vmatmul.mubr.bf16.gmra.mxu0 %v869
  %v905 = vpop.f32.mrf.mxu0
  %v906 = vadd.f32 0.0, %v905
  %v907 = vpop.f32.mrf.mxu0
  %v908 = vpop.f32.mrf.mxu0
  %v909 = vpop.f32.mrf.mxu0
  %910 = vdwg.mxu0
  %v911 = vadd.f32 %v421, %v906
  %v912 = vmul.f32 %v911, %v428
  %v913 = vtanh.pop %v912
  %v914 = vmul.f32 %v913, %v428
  %v915 = vadd.f32 %v914, %v429
  %v916 = vmul.f32 %v915, %v857
  %918 = vrot.lane.b32.xlu0 %v915, 64
  %v919 = vpop.permute.xlu0 %918
  %v921 = vmul.f32 %v915, %v919
  %923 = vrot.lane.b32.xlu0 %v921, 32
  %v924 = vpop.permute.xlu0 %923
  %v926 = vadd.f32 %v916, %v924
  %v927 = vtanh.pop %v926
  %929 = vrot.lane.b32.xlu0 %v927, 64
  %v930 = vpop.permute.xlu0 %929
  %v932 = vmul.f32 %v915, %v930
  %v933 = vpack.c.bf16 %v932, %v932
  %935 = vrot.lane.b32.xlu0 %v933, 32
  %v936 = vpop.permute.xlu0 %935
  %v938 = vsel %vm449, %v936, 0
  %940 = vmatprep.subr.bf16.mxu0 0
  %941 = vmatpush1.bf16.msra.mxu0 0
  %942 = vmatprep.subr.bf16.mxu0 0
  %943 = vmatpush1.bf16.msra.mxu0 0
  %944 = vmatprep.subr.bf16.mxu0 0
  %945 = vmatpush1.bf16.msra.mxu0 0
  %946 = vmatprep.subr.bf16.mxu0 0
  %947 = vmatpush1.bf16.msra.mxu0 0
  %948 = vmatprep.subr.bf16.mxu0 0
  %949 = vmatpush1.bf16.msra.mxu0 0
  %950 = vmatprep.subr.bf16.mxu0 0
  %951 = vmatpush1.bf16.msra.mxu0 0
  %952 = vmatprep.subr.bf16.mxu0 0
  %953 = vmatpush1.bf16.msra.mxu0 %v446
  %954 = vmatprep.subr.bf16.mxu0 0
  %955 = vmatpush1.bf16.msra.mxu0 %v445
  %956 = vmatprep.subr.bf16.mxu0 0
  %957 = vmatpush2.bf16.msra.mxu0 0
  %958 = vmatprep.subr.bf16.mxu0 0
  %959 = vmatpush2.bf16.msra.mxu0 0
  %960 = vmatprep.subr.bf16.mxu0 0
  %961 = vmatpush2.bf16.msra.mxu0 0
  %962 = vmatprep.subr.bf16.mxu0 0
  %963 = vmatpush2.bf16.msra.mxu0 0
  %964 = vmatprep.subr.bf16.mxu0 0
  %965 = vmatpush2.bf16.msra.mxu0 0
  %966 = vmatprep.subr.bf16.mxu0 0
  %967 = vmatpush2.bf16.msra.mxu0 0
  %968 = vmatprep.subr.bf16.mxu0 0
  %969 = vmatpush2.bf16.msra.mxu0 0
  %970 = vmatprep.subr.bf16.mxu0 0
  %971 = vmatpush2.bf16.msra.mxu0 0
  %972 = vmatprep.mubr.bf16.mxu0 0
  %973 = vmatmul.mubr.bf16.gmra.mxu0 %v938
  %v974 = vpop.f32.mrf.mxu0
  %v975 = vadd.f32 0.0, %v974
  %v976 = vpop.f32.mrf.mxu0
  %v977 = vpop.f32.mrf.mxu0
  %v978 = vpop.f32.mrf.mxu0
  %979 = vdwg.mxu0
  %v980 = vadd.f32 %v422, %v975
  %v981 = vmul.f32 %v980, %v428
  %v982 = vtanh.pop %v981
  %v983 = vmul.f32 %v982, %v428
  %v984 = vadd.f32 %v983, %v429
  %v985 = vmul.f32 %v984, %v926
  %987 = vrot.lane.b32.xlu0 %v984, 64
  %v988 = vpop.permute.xlu0 %987
  %v990 = vmul.f32 %v984, %v988
  %992 = vrot.lane.b32.xlu0 %v990, 32
  %v993 = vpop.permute.xlu0 %992
  %v995 = vadd.f32 %v985, %v993
  %v996 = vtanh.pop %v995
  %998 = vrot.lane.b32.xlu0 %v996, 64
  %v999 = vpop.permute.xlu0 %998
  %v1001 = vmul.f32 %v984, %v999
  %1003 = vrot.lane.b32.xlu0 %v1001, 32
  %v1004 = vpop.permute.xlu0 %1003
  %1006 = vst.msk [vmem:[%s5] sm:$0xff] %vm449, %v1004
  %1008 = vrot.lane.b32.xlu0 %v995, 96
  %v1009 = vpop.permute.xlu0 %1008
  %1011 = vst.msk [vmem:[%s5 + $0x8] sm:$0xff] %vm449, %v1009
  %v1012 = vpack.c.bf16 %v587, %v518
  %v1013 = vpack.c.bf16 %v725, %v656
  %v1014 = vpack.c.bf16 %v863, %v794
  %v1015 = vpack.c.bf16 %v1001, %v932
  %v1016 = vld [vmem:[%s1 + $0x6c] sm:$0xf]
  %v1017 = vld [vmem:[%s1 + $0x70] sm:$0xf]
  %v1018 = vld [vmem:[%s1 + $0x74] sm:$0xf]
  %v1019 = vld [vmem:[%s1 + $0x78] sm:$0xf]
  %v1020 = vlaneseq
  %v1021 = vshrl.u32 %v1020, 7
  %v1022 = vsub.s32 1, %v1021
  %v1023 = vrot.slane %v20, %v1022
  %1028 = vrot.lane.b32.xlu0 %v1012, 32
  %v1029 = vpop.permute.xlu0 %1028
  %1030 = vrot.lane.b32.xlu0 %v1013, 32
  %v1031 = vpop.permute.xlu0 %1030
  %1032 = vrot.lane.b32.xlu0 %v1014, 32
  %v1033 = vpop.permute.xlu0 %1032
  %1034 = vrot.lane.b32.xlu0 %v1015, 32
  %v1035 = vpop.permute.xlu0 %1034
  %v1040 = vunpack.c.l.b16 %v1016
  %v1041 = vunpack.c.l.b16 %v1017
  %v1042 = vunpack.c.l.b16 %v1018
  %v1043 = vunpack.c.l.b16 %v1019
  %v1044 = vpack.c.b16 %v1041, %v1040
  %v1045 = vpack.c.b16 %v1043, %v1042
  %v1049 = vsel %vm449, %v1029, 0
  %v1052 = vsel %vm449, %v1031, 0
  %v1055 = vsel %vm449, %v1033, 0
  %v1058 = vsel %vm449, %v1035, 0
  %1060 = vmatprep.subr.bf16.mxu0 0
  %1061 = vmatpush1.bf16.msra.mxu0 0
  %1062 = vmatprep.subr.bf16.mxu0 0
  %1063 = vmatpush1.bf16.msra.mxu0 0
  %1064 = vmatprep.subr.bf16.mxu0 0
  %1065 = vmatpush1.bf16.msra.mxu0 0
  %1066 = vmatprep.subr.bf16.mxu0 0
  %1067 = vmatpush1.bf16.msra.mxu0 0
  %1068 = vmatprep.subr.bf16.mxu0 0
  %1069 = vmatpush1.bf16.msra.mxu0 0
  %1070 = vmatprep.subr.bf16.mxu0 0
  %1071 = vmatpush1.bf16.msra.mxu0 0
  %1072 = vmatprep.subr.bf16.mxu0 0
  %1073 = vmatpush1.bf16.msra.mxu0 %v1045
  %1074 = vmatprep.subr.bf16.mxu0 0
  %1075 = vmatpush1.bf16.msra.mxu0 %v1044
  %1076 = vmatprep.subr.bf16.mxu0 0
  %1077 = vmatpush2.bf16.msra.mxu0 0
  %1078 = vmatprep.subr.bf16.mxu0 0
  %1079 = vmatpush2.bf16.msra.mxu0 0
  %1080 = vmatprep.subr.bf16.mxu0 0
  %1081 = vmatpush2.bf16.msra.mxu0 0
  %1082 = vmatprep.subr.bf16.mxu0 0
  %1083 = vmatpush2.bf16.msra.mxu0 0
  %1084 = vmatprep.subr.bf16.mxu0 0
  %1085 = vmatpush2.bf16.msra.mxu0 0
  %1086 = vmatprep.subr.bf16.mxu0 0
  %1087 = vmatpush2.bf16.msra.mxu0 0
  %1088 = vmatprep.subr.bf16.mxu0 0
  %1089 = vmatpush2.bf16.msra.mxu0 0
  %1090 = vmatprep.subr.bf16.mxu0 0
  %1091 = vmatpush2.bf16.msra.mxu0 0
  %1092 = vmatprep.mubr.bf16.mxu0 0
  %1093 = vmatmul.mubr.bf16.gmra.mxu0 %v1049
  %v1094 = vpop.f32.mrf.mxu0
  %v1095 = vadd.f32 %v1023, %v1094
  %v1096 = vpop.f32.mrf.mxu0
  %v1097 = vpop.f32.mrf.mxu0
  %v1098 = vadd.f32 %v1023, %v1097
  %v1099 = vpop.f32.mrf.mxu0
  %1100 = vmatprep.mubr.bf16.mxu0 0
  %1101 = vmatmul.mubr.bf16.gmra.mxu0 %v1052
  %v1102 = vpop.f32.mrf.mxu0
  %v1103 = vadd.f32 %v1023, %v1102
  %v1104 = vpop.f32.mrf.mxu0
  %v1105 = vpop.f32.mrf.mxu0
  %v1106 = vadd.f32 %v1023, %v1105
  %v1107 = vpop.f32.mrf.mxu0
  %1108 = vmatprep.mubr.bf16.mxu0 0
  %1109 = vmatmul.mubr.bf16.gmra.mxu0 %v1055
  %v1110 = vpop.f32.mrf.mxu0
  %v1111 = vadd.f32 %v1023, %v1110
  %v1112 = vpop.f32.mrf.mxu0
  %v1113 = vpop.f32.mrf.mxu0
  %v1114 = vadd.f32 %v1023, %v1113
  %v1115 = vpop.f32.mrf.mxu0
  %1116 = vmatprep.mubr.bf16.mxu0 0
  %1117 = vmatmul.mubr.bf16.gmra.mxu0 %v1058
  %v1118 = vpop.f32.mrf.mxu0
  %v1119 = vadd.f32 %v1023, %v1118
  %v1120 = vpop.f32.mrf.mxu0
  %v1121 = vpop.f32.mrf.mxu0
  %v1122 = vadd.f32 %v1023, %v1121
  %v1123 = vpop.f32.mrf.mxu0
  %1124 = vdwg.mxu0
  %1125 = vst [vmem:[%s4] sm:$0xff] %v1095
  %1126 = vst [vmem:[%s4 + $0x8] sm:$0xff] %v1098
  %1127 = vst [vmem:[%s4 + $0x10] sm:$0xff] %v1103
  %1128 = vst [vmem:[%s4 + $0x18] sm:$0xff] %v1106
  %1129 = vst [vmem:[%s4 + $0x20] sm:$0xff] %v1111
  %1130 = vst [vmem:[%s4 + $0x28] sm:$0xff] %v1114
  %1131 = vst [vmem:[%s4 + $0x30] sm:$0xff] %v1119
  %1132 = vst [vmem:[%s4 + $0x38] sm:$0xff] %v1122
  // Predicated region
  $region18: #{crnn_forward.1} parent=0 // pred_check
    _
  $region19: #{crnn_forward.1} parent=0 // pred_check_branch
    %1134 = sbr.rel (0) target = $region21
  $region20: #{crnn_forward.1} parent=0 // pred_region
    _
  $region21: #{crnn_forward.1} parent=0 // pred_fallthru
    _
  // Predicated region
  $region22: #{crnn_forward.1} parent=0 // pred_check
    _
  $region23: #{crnn_forward.1} parent=0 // pred_check_branch
    %1136 = sbr.rel (0) target = $region25
  $region24: #{crnn_forward.1} parent=0 // pred_region
    _
  $region25: #{crnn_forward.1} parent=0 // pred_fallthru
    _
  // Predicated region
  $region26: #{crnn_forward.1} parent=0 // pred_check
    _
  $region27: #{crnn_forward.1} parent=0 // pred_check_branch
    %1138 = sbr.rel (0) target = $region29
  $region28: #{crnn_forward.1} parent=0 // pred_region
    _
  $region29: #{crnn_forward.1} parent=0 // pred_fallthru
    _
  // Predicated region
  $region30: #{crnn_forward.1} parent=0 // pred_check
    _
  $region31: #{crnn_forward.1} parent=0 // pred_check_branch
    %1140 = sbr.rel (0) target = $region33
  $region32: #{crnn_forward.1} parent=0 // pred_region
    _
  $region33: #{crnn_forward.1} parent=0 // pred_fallthru
    _

</llo_original>
